<compile_context>
chip_gen: v5e
topology: v5e:2x2
jax: 0.10.0
libtpu: 0.0.40
codegen_flags: <defaults>
</compile_context>

<pallas_src>
import jax
import jax.numpy as jnp
from jax import lax
from jax.experimental import pallas as pl
from jax.experimental.pallas import tpu as pltpu

# ----------------------------- model hyper-params (small synthetic ViT) ------
BATCH = 2
IN_CHANS = 3
IMG = 16
PATCH = 8
GRID_H = IMG // PATCH
GRID_W = IMG // PATCH
N_PATCH = GRID_H * GRID_W              # 4
SEQ = N_PATCH + 1                      # 5 tokens (cls + patches)
PATCH_DIM = IN_CHANS * PATCH * PATCH   # 192
EMBED = 32
HEADS = 4
HEAD_DIM = EMBED // HEADS              # 8
DEPTH = 2
MLP_HIDDEN = 4 * EMBED                 # 128 (lane-dense)
NUM_CLASSES = 10                       # classifier exists but is unused in eval forward
LN_EPS = 1e-6
BN_EPS = 1e-5
ATTN_SCALE = HEAD_DIM ** -0.5
NEG_INF = -1e30


# ----------------------------- in-kernel helpers ------------------------------
def _layernorm(x, g, b):
    mu = jnp.mean(x, axis=-1, keepdims=True)
    var = jnp.mean(jnp.square(x - mu), axis=-1, keepdims=True)
    return (x - mu) * lax.rsqrt(var + LN_EPS) * g + b


def _gelu_erf(x):
    # exact (erf) GELU, matching torch.nn.GELU default
    return 0.5 * x * (1.0 + lax.erf(x * 0.7071067811865476))


def _mm(a, w):
    # bf16 MXU inputs, f32 accumulation
    return jnp.dot(a.astype(jnp.bfloat16), w.astype(jnp.bfloat16),
                   preferred_element_type=jnp.float32)


# ----------------------------- fully fused ViT kernel (single grid step) ------
def _fused_vit_kernel(patches_ref, patch_w_ref, misc_ref, blk_vec_ref,
                      qkv_w_ref, proj_w_ref, fc1_w_ref, fc2_w_ref,
                      head_mask_ref, batch_bias_ref, feat_ref):
    B = feat_ref.shape[0]
    T = B * SEQ

    misc = misc_ref[...]                      # (T+2, D) f32
    pos_add = misc[0:T, :]                    # cls/pos/conv-bias additive rows
    g_eff = misc[T:T + 1, :]                  # final LN gamma folded with eval BN scale
    b_eff = misc[T + 1:T + 2, :]              # final LN beta  folded with eval BN shift
    head_mask = head_mask_ref[...]            # (H*T, D) f32 block-diagonal head mask
    batch_bias = batch_bias_ref[...]          # (H*T, T) f32, -1e30 for cross-image keys

    # --- patch embedding for the whole batch; cls rows are zero-padded in patches
    #     so they only receive the (cls_token + pos) additive row ---
    xx = _mm(patches_ref[...], patch_w_ref[...]) + pos_add      # (T, D) f32 residual stream

    for d in range(DEPTH):                    # depth statically unrolled in-kernel
        blk = blk_vec_ref[d]                  # (8, 128) consolidated per-block vectors
        ln1_g = blk[0:1, 0:EMBED]
        ln1_b = blk[1:2, 0:EMBED]
        qkv_b = blk[2:3, 0:3 * EMBED]
        proj_b = blk[3:4, 0:EMBED]
        ln2_g = blk[4:5, 0:EMBED]
        ln2_b = blk[5:6, 0:EMBED]
        fc1_b = blk[6:7, 0:MLP_HIDDEN]
        fc2_b = blk[7:8, 0:EMBED]

        # ---- multi-head self-attention: (head, image, token) packed along sublanes ----
        h1 = _layernorm(xx, ln1_g, ln1_b)
        qkv = _mm(h1, qkv_w_ref[d]) + qkv_b            # (T, 3D); attn scale pre-folded into q
        q = qkv[:, 0:EMBED]
        k = qkv[:, EMBED:2 * EMBED]
        v = qkv[:, 2 * EMBED:3 * EMBED]

        # packed queries: row h*T + t holds q_t masked to head h's feature block
        q_rep = jnp.concatenate([q] * HEADS, axis=0) * head_mask          # (H*T, D)
        scores = lax.dot_general(
            q_rep.astype(jnp.bfloat16), k.astype(jnp.bfloat16),
            (((1,), (1,)), ((), ())), preferred_element_type=jnp.float32)  # (H*T, T)
        scores = scores + batch_bias                   # mask cross-image attention
        m = jnp.max(scores, axis=-1, keepdims=True)    # exact per-(query, head) max
        e = jnp.exp(scores - m)                        # cross-image cols underflow to 0
        den = jnp.sum(e, axis=-1, keepdims=True)
        attn_w = e * pl.reciprocal(den, approx=True)   # EUP slot; ~1e-3 rel err (inference-OK)
        ctx_p = jnp.dot(attn_w.astype(jnp.bfloat16), v.astype(jnp.bfloat16),
                        preferred_element_type=jnp.float32)               # (H*T, D)
        ctx_p = ctx_p * head_mask                      # keep only the owning head's dims
        ctx = ctx_p[0:T, :]
        for h in range(1, HEADS):                      # collapse disjoint head row-blocks
            ctx = ctx + ctx_p[h * T:(h + 1) * T, :]

        xx = xx + _mm(ctx, proj_w_ref[d]) + proj_b     # residual

        # ---- MLP ----
        h2 = _layernorm(xx, ln2_g, ln2_b)
        f = _gelu_erf(_mm(h2, fc1_w_ref[d]) + fc1_b)   # (T, 128)
        xx = xx + _mm(f, fc2_w_ref[d]) + fc2_b         # residual

    # --- final LayerNorm on cls tokens fused with eval BatchNorm1d bottleneck ---
    cls = jnp.concatenate([xx[b * SEQ:b * SEQ + 1, :] for b in range(B)], axis=0)  # (B, D)
    feat_ref[...] = _layernorm(cls, g_eff, b_eff)


# ----------------------------- parameter init (synthetic) ----------------------
def init_params(key):
    keys = jax.random.split(key, 8 + DEPTH)
    p = {
        "patch_w": 0.02 * jax.random.normal(keys[0], (PATCH_DIM, EMBED), jnp.float32),
        "patch_b": jnp.zeros((EMBED,), jnp.float32),
        "cls_token": 0.02 * jax.random.normal(keys[1], (1, 1, EMBED), jnp.float32),
        "pos_embed": 0.02 * jax.random.normal(keys[2], (1, SEQ, EMBED), jnp.float32),
        "ln_g": jnp.ones((EMBED,), jnp.float32),
        "ln_b": jnp.zeros((EMBED,), jnp.float32),
        # BatchNorm1d bottleneck (weights_init_kaiming: gamma=1, beta=0; eval running stats)
        "bn_g": jnp.ones((EMBED,), jnp.float32),
        "bn_b": jnp.zeros((EMBED,), jnp.float32),
        "bn_mean": jnp.zeros((EMBED,), jnp.float32),
        "bn_var": jnp.ones((EMBED,), jnp.float32),
        # classifier (std=0.001, no bias) -- unused in eval forward
        "cls_w": 0.001 * jax.random.normal(keys[3], (EMBED, NUM_CLASSES), jnp.float32),
    }
    blocks = []
    for di in range(DEPTH):
        bk = jax.random.split(keys[8 + di], 4)
        blocks.append({
            "ln1_g": jnp.ones((EMBED,), jnp.float32),
            "ln1_b": jnp.zeros((EMBED,), jnp.float32),
            "qkv_w": 0.02 * jax.random.normal(bk[0], (EMBED, 3 * EMBED), jnp.float32),
            "qkv_b": jnp.zeros((3 * EMBED,), jnp.float32),
            "proj_w": 0.02 * jax.random.normal(bk[1], (EMBED, EMBED), jnp.float32),
            "proj_b": jnp.zeros((EMBED,), jnp.float32),
            "ln2_g": jnp.ones((EMBED,), jnp.float32),
            "ln2_b": jnp.zeros((EMBED,), jnp.float32),
            "fc1_w": 0.02 * jax.random.normal(bk[2], (EMBED, MLP_HIDDEN), jnp.float32),
            "fc1_b": jnp.zeros((MLP_HIDDEN,), jnp.float32),
            "fc2_w": 0.02 * jax.random.normal(bk[3], (MLP_HIDDEN, EMBED), jnp.float32),
            "fc2_b": jnp.zeros((EMBED,), jnp.float32),
        })
    p["blocks"] = blocks
    return p


def prepare_params(p):
    """One-time prep: stack per-block weights, fold attn scale + BN + conv bias,
    pack all tiny vectors into lane-padded slabs, cast matmul weights to bf16."""
    def stack(name):
        return jnp.stack([blk[name] for blk in p["blocks"]], axis=0)

    qkv_w = stack("qkv_w")                           # (DEPTH, D, 3D)
    qkv_b = stack("qkv_b")                           # (DEPTH, 3D)
    # fold the 1/sqrt(head_dim) attention scale into the q projection
    qkv_w = qkv_w.at[:, :, :EMBED].multiply(ATTN_SCALE)
    qkv_b = qkv_b.at[:, :EMBED].multiply(ATTN_SCALE)

    bn_scale = p["bn_g"] * lax.rsqrt(p["bn_var"] + BN_EPS)
    bn_shift = p["bn_b"] - p["bn_mean"] * bn_scale
    # fold eval-mode BN into the final LayerNorm affine
    g_eff = (p["ln_g"] * bn_scale).reshape(1, EMBED)
    b_eff = (p["ln_b"] * bn_scale + bn_shift).reshape(1, EMBED)

    # per-token additive term for one image:
    #   row 0            = cls_token + pos[0]          (cls row gets no conv bias)
    #   rows 1..SEQ-1    = pos[s] + patch-embed bias
    tok_add = jnp.concatenate(
        [p["cls_token"][0] + p["pos_embed"][0, :1],
         p["pos_embed"][0, 1:] + p["patch_b"][None, :]], axis=0)          # (SEQ, D)

    def row128(v):
        v = v.reshape(1, -1)
        return jnp.pad(v, ((0, 0), (0, 128 - v.shape[1])))

    blk_rows = []
    for d in range(DEPTH):
        blk = p["blocks"][d]
        rows = jnp.concatenate([
            row128(blk["ln1_g"]), row128(blk["ln1_b"]),
            row128(qkv_b[d]),     row128(blk["proj_b"]),
            row128(blk["ln2_g"]), row128(blk["ln2_b"]),
            row128(blk["fc1_b"]), row128(blk["fc2_b"])], axis=0)          # (8, 128)
        blk_rows.append(rows)
    blk_vec = jnp.stack(blk_rows, axis=0)                                 # (DEPTH, 8, 128)

    bf16 = jnp.bfloat16
    return {
        "patch_w": p["patch_w"].astype(bf16),        # (PATCH_DIM, D)
        "tok_add": tok_add,                          # (SEQ, D) f32
        "g_eff": g_eff,                              # (1, D)
        "b_eff": b_eff,                              # (1, D)
        "blk_vec": blk_vec,                          # (DEPTH, 8, 128) f32
        "qkv_w": qkv_w.astype(bf16),                 # (DEPTH, D, 3D)
        "proj_w": stack("proj_w").astype(bf16),      # (DEPTH, D, D)
        "fc1_w": stack("fc1_w").astype(bf16),        # (DEPTH, D, 4D)
        "fc2_w": stack("fc2_w").astype(bf16),        # (DEPTH, 4D, D)
    }


# ----------------------------- forward pass -------------------------------------
def _full_spec(shape):
    zeros = (0,) * len(shape)
    return pl.BlockSpec(shape, lambda i, z=zeros: z)


@jax.jit
def build_mix_vit_forward(kp, x):
    """Eval-mode forward of build_mix_vit. x: (B, C, H, W) NCHW float32 -> (B, D)."""
    B = x.shape[0]
    T = B * SEQ

    # TODO(synk): Conv2d(k=8,s=8) patch "unfold" stays as a one-time host-side
    # reshape/transpose (+ zero cls-row pad); everything downstream is one fused kernel.
    patches = x.reshape(B, IN_CHANS, GRID_H, PATCH, GRID_W, PATCH)
    patches = patches.transpose(0, 2, 4, 1, 3, 5).reshape(B, N_PATCH, PATCH_DIM)
    patches = jnp.pad(patches, ((0, 0), (1, 0), (0, 0))).reshape(T, PATCH_DIM)

    # small per-token additive slab: pos/cls/bias rows then folded final-LN+BN gamma/beta
    misc = jnp.concatenate([jnp.tile(kp["tok_add"], (B, 1)), kp["g_eff"], kp["b_eff"]],
                           axis=0)                                        # (T+2, D)

    # constant packed-attention masks (constant-folded by XLA at compile time)
    row_head = lax.broadcasted_iota(jnp.int32, (HEADS * T, EMBED), 0) // T
    col_head = lax.broadcasted_iota(jnp.int32, (HEADS * T, EMBED), 1) // HEAD_DIM
    head_mask = (row_head == col_head).astype(jnp.float32)                # (H*T, D)
    q_img = (lax.broadcasted_iota(jnp.int32, (HEADS * T, T), 0) % T) // SEQ
    k_img = lax.broadcasted_iota(jnp.int32, (HEADS * T, T), 1) // SEQ
    batch_bias = jnp.where(q_img == k_img, 0.0, NEG_INF).astype(jnp.float32)  # (H*T, T)

    in_specs = [
        _full_spec((T, PATCH_DIM)),                 # patches (cls rows zero-padded)
        _full_spec((PATCH_DIM, EMBED)),             # patch_w
        _full_spec((T + 2, EMBED)),                 # misc slab
        _full_spec((DEPTH, 8, 128)),                # per-block vector slab
        _full_spec((DEPTH, EMBED, 3 * EMBED)),      # qkv_w
        _full_spec((DEPTH, EMBED, EMBED)),          # proj_w
        _full_spec((DEPTH, EMBED, MLP_HIDDEN)),     # fc1_w
        _full_spec((DEPTH, MLP_HIDDEN, EMBED)),     # fc2_w
        _full_spec((HEADS * T, EMBED)),             # head_mask
        _full_spec((HEADS * T, T)),                 # batch_bias
    ]
    out_specs = pl.BlockSpec((B, EMBED), lambda i: (0, 0))

    feat = pl.pallas_call(
        _fused_vit_kernel,
        out_shape=jax.ShapeDtypeStruct((B, EMBED), jnp.float32),
        grid_spec=pltpu.PrefetchScalarGridSpec(
            num_scalar_prefetch=0,
            grid=(1,),                               # single grid step: depth & batch fused
            in_specs=in_specs,
            out_specs=out_specs),
        compiler_params=pltpu.CompilerParams(
            dimension_semantics=("arbitrary",)),
    )(patches, kp["patch_w"], misc, kp["blk_vec"],
      kp["qkv_w"], kp["proj_w"], kp["fc1_w"], kp["fc2_w"],
      head_mask, batch_bias)

    return feat


if __name__ == "__main__":
    key = jax.random.PRNGKey(0)
    k_param, k_input = jax.random.split(key)
    params = init_params(k_param)
    kparams = prepare_params(params)
    x = jax.random.normal(k_input, (BATCH, IN_CHANS, IMG, IMG), jnp.float32)

    feat = build_mix_vit_forward(kparams, x)
    feat = jax.block_until_ready(feat)
    assert feat.shape == (BATCH, EMBED) and feat.dtype == jnp.float32
    assert bool(jnp.all(jnp.isfinite(feat)))
    print("KERNEL_OK")
</pallas_src>

<mosaic_0001>
module attributes {stable_mosaic.version = 11 : i64} {
  func.func @_fused_vit_kernel(%arg0: i32, %arg1: memref<10x192xf32, #tpu.memory_space<vmem>>, %arg2: memref<192x32xbf16, #tpu.memory_space<vmem>>, %arg3: memref<12x32xf32, #tpu.memory_space<vmem>>, %arg4: memref<2x8x128xf32, #tpu.memory_space<vmem>>, %arg5: memref<2x32x96xbf16, #tpu.memory_space<vmem>>, %arg6: memref<2x32x32xbf16, #tpu.memory_space<vmem>>, %arg7: memref<2x32x128xbf16, #tpu.memory_space<vmem>>, %arg8: memref<2x128x32xbf16, #tpu.memory_space<vmem>>, %arg9: memref<40x32xf32, #tpu.memory_space<vmem>>, %arg10: memref<40x10xf32, #tpu.memory_space<vmem>>, %arg11: memref<2x32xf32, #tpu.memory_space<vmem>>) attributes {dimension_semantics = [#tpu.dimension_semantics<arbitrary>], iteration_bounds = array<i64: 1>, scalar_prefetch = 0 : i64, scratch_operands = 0 : i64, tpu.core_type = #tpu.core_type<tc>, window_params = [{pipeline_mode = #tpu.pipeline_mode<synchronous>, transform_indices = @transform_0, window_bounds = array<i64: 10, 192>}, {pipeline_mode = #tpu.pipeline_mode<synchronous>, transform_indices = @transform_1, window_bounds = array<i64: 192, 32>}, {pipeline_mode = #tpu.pipeline_mode<synchronous>, transform_indices = @transform_2, window_bounds = array<i64: 12, 32>}, {pipeline_mode = #tpu.pipeline_mode<synchronous>, transform_indices = @transform_3, window_bounds = array<i64: 2, 8, 128>}, {pipeline_mode = #tpu.pipeline_mode<synchronous>, transform_indices = @transform_4, window_bounds = array<i64: 2, 32, 96>}, {pipeline_mode = #tpu.pipeline_mode<synchronous>, transform_indices = @transform_5, window_bounds = array<i64: 2, 32, 32>}, {pipeline_mode = #tpu.pipeline_mode<synchronous>, transform_indices = @transform_6, window_bounds = array<i64: 2, 32, 128>}, {pipeline_mode = #tpu.pipeline_mode<synchronous>, transform_indices = @transform_7, window_bounds = array<i64: 2, 128, 32>}, {pipeline_mode = #tpu.pipeline_mode<synchronous>, transform_indices = @transform_8, window_bounds = array<i64: 40, 32>}, {pipeline_mode = #tpu.pipeline_mode<synchronous>, transform_indices = @transform_9, window_bounds = array<i64: 40, 10>}, {pipeline_mode = #tpu.pipeline_mode<synchronous>, transform_indices = @transform_10, window_bounds = array<i64: 2, 32>}]} {
    %c0 = arith.constant 0 : index
    %c0_0 = arith.constant 0 : index
    %0 = vector.load %arg3[%c0, %c0_0] : memref<12x32xf32, #tpu.memory_space<vmem>>, vector<12x32xf32>
    %1 = vector.extract_strided_slice %0 {offsets = [0, 0], sizes = [10, 32], strides = [1, 1]} : vector<12x32xf32> to vector<10x32xf32>
    %2 = vector.extract_strided_slice %0 {offsets = [10, 0], sizes = [1, 32], strides = [1, 1]} : vector<12x32xf32> to vector<1x32xf32>
    %3 = vector.extract_strided_slice %0 {offsets = [11, 0], sizes = [1, 32], strides = [1, 1]} : vector<12x32xf32> to vector<1x32xf32>
    %c0_1 = arith.constant 0 : index
    %c0_2 = arith.constant 0 : index
    %4 = vector.load %arg9[%c0_1, %c0_2] : memref<40x32xf32, #tpu.memory_space<vmem>>, vector<40x32xf32>
    %c0_3 = arith.constant 0 : index
    %c0_4 = arith.constant 0 : index
    %5 = vector.load %arg10[%c0_3, %c0_4] : memref<40x10xf32, #tpu.memory_space<vmem>>, vector<40x10xf32>
    %c0_5 = arith.constant 0 : index
    %c0_6 = arith.constant 0 : index
    %6 = vector.load %arg1[%c0_5, %c0_6] : memref<10x192xf32, #tpu.memory_space<vmem>>, vector<10x192xf32>
    %c0_7 = arith.constant 0 : index
    %c0_8 = arith.constant 0 : index
    %7 = vector.load %arg2[%c0_7, %c0_8] : memref<192x32xbf16, #tpu.memory_space<vmem>>, vector<192x32xbf16>
    %8 = arith.truncf %6 : vector<10x192xf32> to vector<10x192xbf16>
    %cst = arith.constant dense<0.000000e+00> : vector<10x32xf32>
    %9 = tpu.matmul %8, %7, %cst {dimension_numbers = #tpu.dot_dimension_numbers<[1], [0], [0], [1], [0, 0, 1, 1], [], []>} : vector<10x192xbf16>, vector<192x32xbf16>, vector<10x32xf32> -> vector<10x32xf32>
    %10 = arith.addf %9, %1 : vector<10x32xf32>
    %c0_9 = arith.constant 0 : index
    %c0_10 = arith.constant 0 : index
    %c0_11 = arith.constant 0 : index
    %11 = vector.load %arg4[%c0_9, %c0_10, %c0_11] : memref<2x8x128xf32, #tpu.memory_space<vmem>>, vector<1x8x128xf32>
    %12 = vector.shape_cast %11 : vector<1x8x128xf32> to vector<8x128xf32>
    %13 = vector.extract_strided_slice %12 {offsets = [0, 0], sizes = [1, 32], strides = [1, 1]} : vector<8x128xf32> to vector<1x32xf32>
    %14 = vector.extract_strided_slice %12 {offsets = [1, 0], sizes = [1, 32], strides = [1, 1]} : vector<8x128xf32> to vector<1x32xf32>
    %15 = vector.extract_strided_slice %12 {offsets = [2, 0], sizes = [1, 96], strides = [1, 1]} : vector<8x128xf32> to vector<1x96xf32>
    %16 = vector.extract_strided_slice %12 {offsets = [3, 0], sizes = [1, 32], strides = [1, 1]} : vector<8x128xf32> to vector<1x32xf32>
    %17 = vector.extract_strided_slice %12 {offsets = [4, 0], sizes = [1, 32], strides = [1, 1]} : vector<8x128xf32> to vector<1x32xf32>
    %18 = vector.extract_strided_slice %12 {offsets = [5, 0], sizes = [1, 32], strides = [1, 1]} : vector<8x128xf32> to vector<1x32xf32>
    %19 = vector.extract_strided_slice %12 {offsets = [6, 0], sizes = [1, 128], strides = [1, 1]} : vector<8x128xf32> to vector<1x128xf32>
    %20 = vector.extract_strided_slice %12 {offsets = [7, 0], sizes = [1, 32], strides = [1, 1]} : vector<8x128xf32> to vector<1x32xf32>
    %cst_12 = arith.constant dense<0.000000e+00> : vector<10xf32>
    %21 = vector.multi_reduction <add>, %10, %cst_12 [1] : vector<10x32xf32> to vector<10xf32>
    %22 = vector.shape_cast %21 : vector<10xf32> to vector<10x1xf32>
    %cst_13 = arith.constant 3.200000e+01 : f32
    %23 = vector.broadcast %cst_13 : f32 to vector<10x1xf32>
    %24 = arith.divf %22, %23 : vector<10x1xf32>
    %25 = vector.broadcast %24 : vector<10x1xf32> to vector<10x32xf32>
    %26 = arith.subf %10, %25 : vector<10x32xf32>
    %27 = arith.mulf %26, %26 : vector<10x32xf32>
    %cst_14 = arith.constant dense<0.000000e+00> : vector<10xf32>
    %28 = vector.multi_reduction <add>, %27, %cst_14 [1] : vector<10x32xf32> to vector<10xf32>
    %29 = vector.shape_cast %28 : vector<10xf32> to vector<10x1xf32>
    %cst_15 = arith.constant 3.200000e+01 : f32
    %30 = vector.broadcast %cst_15 : f32 to vector<10x1xf32>
    %31 = arith.divf %29, %30 : vector<10x1xf32>
    %32 = vector.broadcast %24 : vector<10x1xf32> to vector<10x32xf32>
    %33 = arith.subf %10, %32 : vector<10x32xf32>
    %cst_16 = arith.constant 9.99999997E-7 : f32
    %34 = vector.broadcast %cst_16 : f32 to vector<10x1xf32>
    %35 = arith.addf %31, %34 : vector<10x1xf32>
    %36 = math.rsqrt %35 : vector<10x1xf32>
    %37 = vector.broadcast %36 : vector<10x1xf32> to vector<10x32xf32>
    %38 = arith.mulf %33, %37 : vector<10x32xf32>
    %39 = vector.broadcast %13 : vector<1x32xf32> to vector<10x32xf32>
    %40 = arith.mulf %38, %39 : vector<10x32xf32>
    %41 = vector.broadcast %14 : vector<1x32xf32> to vector<10x32xf32>
    %42 = arith.addf %40, %41 : vector<10x32xf32>
    %c0_17 = arith.constant 0 : index
    %c0_18 = arith.constant 0 : index
    %c0_19 = arith.constant 0 : index
    %43 = vector.load %arg5[%c0_17, %c0_18, %c0_19] : memref<2x32x96xbf16, #tpu.memory_space<vmem>>, vector<1x32x96xbf16>
    %44 = vector.shape_cast %43 : vector<1x32x96xbf16> to vector<32x96xbf16>
    %45 = arith.truncf %42 : vector<10x32xf32> to vector<10x32xbf16>
    %cst_20 = arith.constant dense<0.000000e+00> : vector<10x96xf32>
    %46 = tpu.matmul %45, %44, %cst_20 {dimension_numbers = #tpu.dot_dimension_numbers<[1], [0], [0], [1], [0, 0, 1, 1], [], []>} : vector<10x32xbf16>, vector<32x96xbf16>, vector<10x96xf32> -> vector<10x96xf32>
    %47 = vector.broadcast %15 : vector<1x96xf32> to vector<10x96xf32>
    %48 = arith.addf %46, %47 : vector<10x96xf32>
    %49 = vector.extract_strided_slice %48 {offsets = [0, 0], sizes = [10, 32], strides = [1, 1]} : vector<10x96xf32> to vector<10x32xf32>
    %50 = vector.extract_strided_slice %48 {offsets = [0, 32], sizes = [10, 32], strides = [1, 1]} : vector<10x96xf32> to vector<10x32xf32>
    %51 = vector.extract_strided_slice %48 {offsets = [0, 64], sizes = [10, 32], strides = [1, 1]} : vector<10x96xf32> to vector<10x32xf32>
    %52 = tpu.concatenate %49, %49, %49, %49 in 0 : vector<10x32xf32>, vector<10x32xf32>, vector<10x32xf32>, vector<10x32xf32> -> vector<40x32xf32>
    %53 = arith.mulf %52, %4 : vector<40x32xf32>
    %54 = arith.truncf %53 : vector<40x32xf32> to vector<40x32xbf16>
    %55 = arith.truncf %50 : vector<10x32xf32> to vector<10x32xbf16>
    %cst_21 = arith.constant dense<0.000000e+00> : vector<40x10xf32>
    %56 = tpu.matmul %54, %55, %cst_21 {dimension_numbers = #tpu.dot_dimension_numbers<[1], [1], [0], [0], [0, 0, 1, 0], [], []>} : vector<40x32xbf16>, vector<10x32xbf16>, vector<40x10xf32> -> vector<40x10xf32>
    %57 = arith.addf %56, %5 : vector<40x10xf32>
    %cst_22 = arith.constant dense<0xFF800000> : vector<40xf32>
    %58 = vector.multi_reduction <maximumf>, %57, %cst_22 [1] : vector<40x10xf32> to vector<40xf32>
    %59 = vector.shape_cast %58 : vector<40xf32> to vector<40x1xf32>
    %60 = vector.broadcast %59 : vector<40x1xf32> to vector<40x10xf32>
    %61 = arith.subf %57, %60 : vector<40x10xf32>
    %62 = math.exp %61 : vector<40x10xf32>
    %cst_23 = arith.constant dense<0.000000e+00> : vector<40xf32>
    %63 = vector.multi_reduction <add>, %62, %cst_23 [1] : vector<40x10xf32> to vector<40xf32>
    %64 = vector.shape_cast %63 : vector<40xf32> to vector<40x1xf32>
    %65 = tpu.reciprocal %64 {approx = true} : vector<40x1xf32> -> vector<40x1xf32>
    %66 = vector.broadcast %65 : vector<40x1xf32> to vector<40x10xf32>
    %67 = arith.mulf %62, %66 : vector<40x10xf32>
    %68 = arith.truncf %67 : vector<40x10xf32> to vector<40x10xbf16>
    %69 = arith.truncf %51 : vector<10x32xf32> to vector<10x32xbf16>
    %cst_24 = arith.constant dense<0.000000e+00> : vector<40x32xf32>
    %70 = tpu.matmul %68, %69, %cst_24 {dimension_numbers = #tpu.dot_dimension_numbers<[1], [0], [0], [1], [0, 0, 1, 1], [], []>} : vector<40x10xbf16>, vector<10x32xbf16>, vector<40x32xf32> -> vector<40x32xf32>
    %71 = arith.mulf %70, %4 : vector<40x32xf32>
    %72 = vector.extract_strided_slice %71 {offsets = [0, 0], sizes = [10, 32], strides = [1, 1]} : vector<40x32xf32> to vector<10x32xf32>
    %73 = vector.extract_strided_slice %71 {offsets = [10, 0], sizes = [10, 32], strides = [1, 1]} : vector<40x32xf32> to vector<10x32xf32>
    %74 = arith.addf %72, %73 : vector<10x32xf32>
    %75 = vector.extract_strided_slice %71 {offsets = [20, 0], sizes = [10, 32], strides = [1, 1]} : vector<40x32xf32> to vector<10x32xf32>
    %76 = arith.addf %74, %75 : vector<10x32xf32>
    %77 = vector.extract_strided_slice %71 {offsets = [30, 0], sizes = [10, 32], strides = [1, 1]} : vector<40x32xf32> to vector<10x32xf32>
    %78 = arith.addf %76, %77 : vector<10x32xf32>
    %c0_25 = arith.constant 0 : index
    %c0_26 = arith.constant 0 : index
    %c0_27 = arith.constant 0 : index
    %79 = vector.load %arg6[%c0_25, %c0_26, %c0_27] : memref<2x32x32xbf16, #tpu.memory_space<vmem>>, vector<1x32x32xbf16>
    %80 = vector.shape_cast %79 : vector<1x32x32xbf16> to vector<32x32xbf16>
    %81 = arith.truncf %78 : vector<10x32xf32> to vector<10x32xbf16>
    %cst_28 = arith.constant dense<0.000000e+00> : vector<10x32xf32>
    %82 = tpu.matmul %81, %80, %cst_28 {dimension_numbers = #tpu.dot_dimension_numbers<[1], [0], [0], [1], [0, 0, 1, 1], [], []>} : vector<10x32xbf16>, vector<32x32xbf16>, vector<10x32xf32> -> vector<10x32xf32>
    %83 = arith.addf %10, %82 : vector<10x32xf32>
    %84 = vector.broadcast %16 : vector<1x32xf32> to vector<10x32xf32>
    %85 = arith.addf %83, %84 : vector<10x32xf32>
    %cst_29 = arith.constant dense<0.000000e+00> : vector<10xf32>
    %86 = vector.multi_reduction <add>, %85, %cst_29 [1] : vector<10x32xf32> to vector<10xf32>
    %87 = vector.shape_cast %86 : vector<10xf32> to vector<10x1xf32>
    %cst_30 = arith.constant 3.200000e+01 : f32
    %88 = vector.broadcast %cst_30 : f32 to vector<10x1xf32>
    %89 = arith.divf %87, %88 : vector<10x1xf32>
    %90 = vector.broadcast %89 : vector<10x1xf32> to vector<10x32xf32>
    %91 = arith.subf %85, %90 : vector<10x32xf32>
    %92 = arith.mulf %91, %91 : vector<10x32xf32>
    %cst_31 = arith.constant dense<0.000000e+00> : vector<10xf32>
    %93 = vector.multi_reduction <add>, %92, %cst_31 [1] : vector<10x32xf32> to vector<10xf32>
    %94 = vector.shape_cast %93 : vector<10xf32> to vector<10x1xf32>
    %cst_32 = arith.constant 3.200000e+01 : f32
    %95 = vector.broadcast %cst_32 : f32 to vector<10x1xf32>
    %96 = arith.divf %94, %95 : vector<10x1xf32>
    %97 = vector.broadcast %89 : vector<10x1xf32> to vector<10x32xf32>
    %98 = arith.subf %85, %97 : vector<10x32xf32>
    %cst_33 = arith.constant 9.99999997E-7 : f32
    %99 = vector.broadcast %cst_33 : f32 to vector<10x1xf32>
    %100 = arith.addf %96, %99 : vector<10x1xf32>
    %101 = math.rsqrt %100 : vector<10x1xf32>
    %102 = vector.broadcast %101 : vector<10x1xf32> to vector<10x32xf32>
    %103 = arith.mulf %98, %102 : vector<10x32xf32>
    %104 = vector.broadcast %17 : vector<1x32xf32> to vector<10x32xf32>
    %105 = arith.mulf %103, %104 : vector<10x32xf32>
    %106 = vector.broadcast %18 : vector<1x32xf32> to vector<10x32xf32>
    %107 = arith.addf %105, %106 : vector<10x32xf32>
    %c0_34 = arith.constant 0 : index
    %c0_35 = arith.constant 0 : index
    %c0_36 = arith.constant 0 : index
    %108 = vector.load %arg7[%c0_34, %c0_35, %c0_36] : memref<2x32x128xbf16, #tpu.memory_space<vmem>>, vector<1x32x128xbf16>
    %109 = vector.shape_cast %108 : vector<1x32x128xbf16> to vector<32x128xbf16>
    %110 = arith.truncf %107 : vector<10x32xf32> to vector<10x32xbf16>
    %cst_37 = arith.constant dense<0.000000e+00> : vector<10x128xf32>
    %111 = tpu.matmul %110, %109, %cst_37 {dimension_numbers = #tpu.dot_dimension_numbers<[1], [0], [0], [1], [0, 0, 1, 1], [], []>} : vector<10x32xbf16>, vector<32x128xbf16>, vector<10x128xf32> -> vector<10x128xf32>
    %112 = vector.broadcast %19 : vector<1x128xf32> to vector<10x128xf32>
    %113 = arith.addf %111, %112 : vector<10x128xf32>
    %cst_38 = arith.constant 5.000000e-01 : f32
    %114 = vector.broadcast %cst_38 : f32 to vector<10x128xf32>
    %115 = arith.mulf %114, %113 : vector<10x128xf32>
    %cst_39 = arith.constant 0.707106769 : f32
    %116 = vector.broadcast %cst_39 : f32 to vector<10x128xf32>
    %117 = arith.mulf %113, %116 : vector<10x128xf32>
    %118 = math.erf %117 : vector<10x128xf32>
    %cst_40 = arith.constant 1.000000e+00 : f32
    %119 = vector.broadcast %cst_40 : f32 to vector<10x128xf32>
    %120 = arith.addf %119, %118 : vector<10x128xf32>
    %121 = arith.mulf %115, %120 : vector<10x128xf32>
    %c0_41 = arith.constant 0 : index
    %c0_42 = arith.constant 0 : index
    %c0_43 = arith.constant 0 : index
    %122 = vector.load %arg8[%c0_41, %c0_42, %c0_43] : memref<2x128x32xbf16, #tpu.memory_space<vmem>>, vector<1x128x32xbf16>
    %123 = vector.shape_cast %122 : vector<1x128x32xbf16> to vector<128x32xbf16>
    %124 = arith.truncf %121 : vector<10x128xf32> to vector<10x128xbf16>
    %cst_44 = arith.constant dense<0.000000e+00> : vector<10x32xf32>
    %125 = tpu.matmul %124, %123, %cst_44 {dimension_numbers = #tpu.dot_dimension_numbers<[1], [0], [0], [1], [0, 0, 1, 1], [], []>} : vector<10x128xbf16>, vector<128x32xbf16>, vector<10x32xf32> -> vector<10x32xf32>
    %126 = arith.addf %85, %125 : vector<10x32xf32>
    %127 = vector.broadcast %20 : vector<1x32xf32> to vector<10x32xf32>
    %128 = arith.addf %126, %127 : vector<10x32xf32>
    %c1 = arith.constant 1 : index
    %c0_45 = arith.constant 0 : index
    %c0_46 = arith.constant 0 : index
    %129 = vector.load %arg4[%c1, %c0_45, %c0_46] : memref<2x8x128xf32, #tpu.memory_space<vmem>>, vector<1x8x128xf32>
    %130 = vector.shape_cast %129 : vector<1x8x128xf32> to vector<8x128xf32>
    %131 = vector.extract_strided_slice %130 {offsets = [0, 0], sizes = [1, 32], strides = [1, 1]} : vector<8x128xf32> to vector<1x32xf32>
    %132 = vector.extract_strided_slice %130 {offsets = [1, 0], sizes = [1, 32], strides = [1, 1]} : vector<8x128xf32> to vector<1x32xf32>
    %133 = vector.extract_strided_slice %130 {offsets = [2, 0], sizes = [1, 96], strides = [1, 1]} : vector<8x128xf32> to vector<1x96xf32>
    %134 = vector.extract_strided_slice %130 {offsets = [3, 0], sizes = [1, 32], strides = [1, 1]} : vector<8x128xf32> to vector<1x32xf32>
    %135 = vector.extract_strided_slice %130 {offsets = [4, 0], sizes = [1, 32], strides = [1, 1]} : vector<8x128xf32> to vector<1x32xf32>
    %136 = vector.extract_strided_slice %130 {offsets = [5, 0], sizes = [1, 32], strides = [1, 1]} : vector<8x128xf32> to vector<1x32xf32>
    %137 = vector.extract_strided_slice %130 {offsets = [6, 0], sizes = [1, 128], strides = [1, 1]} : vector<8x128xf32> to vector<1x128xf32>
    %138 = vector.extract_strided_slice %130 {offsets = [7, 0], sizes = [1, 32], strides = [1, 1]} : vector<8x128xf32> to vector<1x32xf32>
    %cst_47 = arith.constant dense<0.000000e+00> : vector<10xf32>
    %139 = vector.multi_reduction <add>, %128, %cst_47 [1] : vector<10x32xf32> to vector<10xf32>
    %140 = vector.shape_cast %139 : vector<10xf32> to vector<10x1xf32>
    %cst_48 = arith.constant 3.200000e+01 : f32
    %141 = vector.broadcast %cst_48 : f32 to vector<10x1xf32>
    %142 = arith.divf %140, %141 : vector<10x1xf32>
    %143 = vector.broadcast %142 : vector<10x1xf32> to vector<10x32xf32>
    %144 = arith.subf %128, %143 : vector<10x32xf32>
    %145 = arith.mulf %144, %144 : vector<10x32xf32>
    %cst_49 = arith.constant dense<0.000000e+00> : vector<10xf32>
    %146 = vector.multi_reduction <add>, %145, %cst_49 [1] : vector<10x32xf32> to vector<10xf32>
    %147 = vector.shape_cast %146 : vector<10xf32> to vector<10x1xf32>
    %cst_50 = arith.constant 3.200000e+01 : f32
    %148 = vector.broadcast %cst_50 : f32 to vector<10x1xf32>
    %149 = arith.divf %147, %148 : vector<10x1xf32>
    %150 = vector.broadcast %142 : vector<10x1xf32> to vector<10x32xf32>
    %151 = arith.subf %128, %150 : vector<10x32xf32>
    %cst_51 = arith.constant 9.99999997E-7 : f32
    %152 = vector.broadcast %cst_51 : f32 to vector<10x1xf32>
    %153 = arith.addf %149, %152 : vector<10x1xf32>
    %154 = math.rsqrt %153 : vector<10x1xf32>
    %155 = vector.broadcast %154 : vector<10x1xf32> to vector<10x32xf32>
    %156 = arith.mulf %151, %155 : vector<10x32xf32>
    %157 = vector.broadcast %131 : vector<1x32xf32> to vector<10x32xf32>
    %158 = arith.mulf %156, %157 : vector<10x32xf32>
    %159 = vector.broadcast %132 : vector<1x32xf32> to vector<10x32xf32>
    %160 = arith.addf %158, %159 : vector<10x32xf32>
    %c1_52 = arith.constant 1 : index
    %c0_53 = arith.constant 0 : index
    %c0_54 = arith.constant 0 : index
    %161 = vector.load %arg5[%c1_52, %c0_53, %c0_54] : memref<2x32x96xbf16, #tpu.memory_space<vmem>>, vector<1x32x96xbf16>
    %162 = vector.shape_cast %161 : vector<1x32x96xbf16> to vector<32x96xbf16>
    %163 = arith.truncf %160 : vector<10x32xf32> to vector<10x32xbf16>
    %cst_55 = arith.constant dense<0.000000e+00> : vector<10x96xf32>
    %164 = tpu.matmul %163, %162, %cst_55 {dimension_numbers = #tpu.dot_dimension_numbers<[1], [0], [0], [1], [0, 0, 1, 1], [], []>} : vector<10x32xbf16>, vector<32x96xbf16>, vector<10x96xf32> -> vector<10x96xf32>
    %165 = vector.broadcast %133 : vector<1x96xf32> to vector<10x96xf32>
    %166 = arith.addf %164, %165 : vector<10x96xf32>
    %167 = vector.extract_strided_slice %166 {offsets = [0, 0], sizes = [10, 32], strides = [1, 1]} : vector<10x96xf32> to vector<10x32xf32>
    %168 = vector.extract_strided_slice %166 {offsets = [0, 32], sizes = [10, 32], strides = [1, 1]} : vector<10x96xf32> to vector<10x32xf32>
    %169 = vector.extract_strided_slice %166 {offsets = [0, 64], sizes = [10, 32], strides = [1, 1]} : vector<10x96xf32> to vector<10x32xf32>
    %170 = tpu.concatenate %167, %167, %167, %167 in 0 : vector<10x32xf32>, vector<10x32xf32>, vector<10x32xf32>, vector<10x32xf32> -> vector<40x32xf32>
    %171 = arith.mulf %170, %4 : vector<40x32xf32>
    %172 = arith.truncf %171 : vector<40x32xf32> to vector<40x32xbf16>
    %173 = arith.truncf %168 : vector<10x32xf32> to vector<10x32xbf16>
    %cst_56 = arith.constant dense<0.000000e+00> : vector<40x10xf32>
    %174 = tpu.matmul %172, %173, %cst_56 {dimension_numbers = #tpu.dot_dimension_numbers<[1], [1], [0], [0], [0, 0, 1, 0], [], []>} : vector<40x32xbf16>, vector<10x32xbf16>, vector<40x10xf32> -> vector<40x10xf32>
    %175 = arith.addf %174, %5 : vector<40x10xf32>
    %cst_57 = arith.constant dense<0xFF800000> : vector<40xf32>
    %176 = vector.multi_reduction <maximumf>, %175, %cst_57 [1] : vector<40x10xf32> to vector<40xf32>
    %177 = vector.shape_cast %176 : vector<40xf32> to vector<40x1xf32>
    %178 = vector.broadcast %177 : vector<40x1xf32> to vector<40x10xf32>
    %179 = arith.subf %175, %178 : vector<40x10xf32>
    %180 = math.exp %179 : vector<40x10xf32>
    %cst_58 = arith.constant dense<0.000000e+00> : vector<40xf32>
    %181 = vector.multi_reduction <add>, %180, %cst_58 [1] : vector<40x10xf32> to vector<40xf32>
    %182 = vector.shape_cast %181 : vector<40xf32> to vector<40x1xf32>
    %183 = tpu.reciprocal %182 {approx = true} : vector<40x1xf32> -> vector<40x1xf32>
    %184 = vector.broadcast %183 : vector<40x1xf32> to vector<40x10xf32>
    %185 = arith.mulf %180, %184 : vector<40x10xf32>
    %186 = arith.truncf %185 : vector<40x10xf32> to vector<40x10xbf16>
    %187 = arith.truncf %169 : vector<10x32xf32> to vector<10x32xbf16>
    %cst_59 = arith.constant dense<0.000000e+00> : vector<40x32xf32>
    %188 = tpu.matmul %186, %187, %cst_59 {dimension_numbers = #tpu.dot_dimension_numbers<[1], [0], [0], [1], [0, 0, 1, 1], [], []>} : vector<40x10xbf16>, vector<10x32xbf16>, vector<40x32xf32> -> vector<40x32xf32>
    %189 = arith.mulf %188, %4 : vector<40x32xf32>
    %190 = vector.extract_strided_slice %189 {offsets = [0, 0], sizes = [10, 32], strides = [1, 1]} : vector<40x32xf32> to vector<10x32xf32>
    %191 = vector.extract_strided_slice %189 {offsets = [10, 0], sizes = [10, 32], strides = [1, 1]} : vector<40x32xf32> to vector<10x32xf32>
    %192 = arith.addf %190, %191 : vector<10x32xf32>
    %193 = vector.extract_strided_slice %189 {offsets = [20, 0], sizes = [10, 32], strides = [1, 1]} : vector<40x32xf32> to vector<10x32xf32>
    %194 = arith.addf %192, %193 : vector<10x32xf32>
    %195 = vector.extract_strided_slice %189 {offsets = [30, 0], sizes = [10, 32], strides = [1, 1]} : vector<40x32xf32> to vector<10x32xf32>
    %196 = arith.addf %194, %195 : vector<10x32xf32>
    %c1_60 = arith.constant 1 : index
    %c0_61 = arith.constant 0 : index
    %c0_62 = arith.constant 0 : index
    %197 = vector.load %arg6[%c1_60, %c0_61, %c0_62] : memref<2x32x32xbf16, #tpu.memory_space<vmem>>, vector<1x32x32xbf16>
    %198 = vector.shape_cast %197 : vector<1x32x32xbf16> to vector<32x32xbf16>
    %199 = arith.truncf %196 : vector<10x32xf32> to vector<10x32xbf16>
    %cst_63 = arith.constant dense<0.000000e+00> : vector<10x32xf32>
    %200 = tpu.matmul %199, %198, %cst_63 {dimension_numbers = #tpu.dot_dimension_numbers<[1], [0], [0], [1], [0, 0, 1, 1], [], []>} : vector<10x32xbf16>, vector<32x32xbf16>, vector<10x32xf32> -> vector<10x32xf32>
    %201 = arith.addf %128, %200 : vector<10x32xf32>
    %202 = vector.broadcast %134 : vector<1x32xf32> to vector<10x32xf32>
    %203 = arith.addf %201, %202 : vector<10x32xf32>
    %cst_64 = arith.constant dense<0.000000e+00> : vector<10xf32>
    %204 = vector.multi_reduction <add>, %203, %cst_64 [1] : vector<10x32xf32> to vector<10xf32>
    %205 = vector.shape_cast %204 : vector<10xf32> to vector<10x1xf32>
    %cst_65 = arith.constant 3.200000e+01 : f32
    %206 = vector.broadcast %cst_65 : f32 to vector<10x1xf32>
    %207 = arith.divf %205, %206 : vector<10x1xf32>
    %208 = vector.broadcast %207 : vector<10x1xf32> to vector<10x32xf32>
    %209 = arith.subf %203, %208 : vector<10x32xf32>
    %210 = arith.mulf %209, %209 : vector<10x32xf32>
    %cst_66 = arith.constant dense<0.000000e+00> : vector<10xf32>
    %211 = vector.multi_reduction <add>, %210, %cst_66 [1] : vector<10x32xf32> to vector<10xf32>
    %212 = vector.shape_cast %211 : vector<10xf32> to vector<10x1xf32>
    %cst_67 = arith.constant 3.200000e+01 : f32
    %213 = vector.broadcast %cst_67 : f32 to vector<10x1xf32>
    %214 = arith.divf %212, %213 : vector<10x1xf32>
    %215 = vector.broadcast %207 : vector<10x1xf32> to vector<10x32xf32>
    %216 = arith.subf %203, %215 : vector<10x32xf32>
    %cst_68 = arith.constant 9.99999997E-7 : f32
    %217 = vector.broadcast %cst_68 : f32 to vector<10x1xf32>
    %218 = arith.addf %214, %217 : vector<10x1xf32>
    %219 = math.rsqrt %218 : vector<10x1xf32>
    %220 = vector.broadcast %219 : vector<10x1xf32> to vector<10x32xf32>
    %221 = arith.mulf %216, %220 : vector<10x32xf32>
    %222 = vector.broadcast %135 : vector<1x32xf32> to vector<10x32xf32>
    %223 = arith.mulf %221, %222 : vector<10x32xf32>
    %224 = vector.broadcast %136 : vector<1x32xf32> to vector<10x32xf32>
    %225 = arith.addf %223, %224 : vector<10x32xf32>
    %c1_69 = arith.constant 1 : index
    %c0_70 = arith.constant 0 : index
    %c0_71 = arith.constant 0 : index
    %226 = vector.load %arg7[%c1_69, %c0_70, %c0_71] : memref<2x32x128xbf16, #tpu.memory_space<vmem>>, vector<1x32x128xbf16>
    %227 = vector.shape_cast %226 : vector<1x32x128xbf16> to vector<32x128xbf16>
    %228 = arith.truncf %225 : vector<10x32xf32> to vector<10x32xbf16>
    %cst_72 = arith.constant dense<0.000000e+00> : vector<10x128xf32>
    %229 = tpu.matmul %228, %227, %cst_72 {dimension_numbers = #tpu.dot_dimension_numbers<[1], [0], [0], [1], [0, 0, 1, 1], [], []>} : vector<10x32xbf16>, vector<32x128xbf16>, vector<10x128xf32> -> vector<10x128xf32>
    %230 = vector.broadcast %137 : vector<1x128xf32> to vector<10x128xf32>
    %231 = arith.addf %229, %230 : vector<10x128xf32>
    %cst_73 = arith.constant 5.000000e-01 : f32
    %232 = vector.broadcast %cst_73 : f32 to vector<10x128xf32>
    %233 = arith.mulf %232, %231 : vector<10x128xf32>
    %cst_74 = arith.constant 0.707106769 : f32
    %234 = vector.broadcast %cst_74 : f32 to vector<10x128xf32>
    %235 = arith.mulf %231, %234 : vector<10x128xf32>
    %236 = math.erf %235 : vector<10x128xf32>
    %cst_75 = arith.constant 1.000000e+00 : f32
    %237 = vector.broadcast %cst_75 : f32 to vector<10x128xf32>
    %238 = arith.addf %237, %236 : vector<10x128xf32>
    %239 = arith.mulf %233, %238 : vector<10x128xf32>
    %c1_76 = arith.constant 1 : index
    %c0_77 = arith.constant 0 : index
    %c0_78 = arith.constant 0 : index
    %240 = vector.load %arg8[%c1_76, %c0_77, %c0_78] : memref<2x128x32xbf16, #tpu.memory_space<vmem>>, vector<1x128x32xbf16>
    %241 = vector.shape_cast %240 : vector<1x128x32xbf16> to vector<128x32xbf16>
    %242 = arith.truncf %239 : vector<10x128xf32> to vector<10x128xbf16>
    %cst_79 = arith.constant dense<0.000000e+00> : vector<10x32xf32>
    %243 = tpu.matmul %242, %241, %cst_79 {dimension_numbers = #tpu.dot_dimension_numbers<[1], [0], [0], [1], [0, 0, 1, 1], [], []>} : vector<10x128xbf16>, vector<128x32xbf16>, vector<10x32xf32> -> vector<10x32xf32>
    %244 = arith.addf %203, %243 : vector<10x32xf32>
    %245 = vector.broadcast %138 : vector<1x32xf32> to vector<10x32xf32>
    %246 = arith.addf %244, %245 : vector<10x32xf32>
    %247 = vector.extract_strided_slice %246 {offsets = [0, 0], sizes = [1, 32], strides = [1, 1]} : vector<10x32xf32> to vector<1x32xf32>
    %248 = vector.extract_strided_slice %246 {offsets = [5, 0], sizes = [1, 32], strides = [1, 1]} : vector<10x32xf32> to vector<1x32xf32>
    %249 = tpu.concatenate %247, %248 in 0 : vector<1x32xf32>, vector<1x32xf32> -> vector<2x32xf32>
    %cst_80 = arith.constant dense<0.000000e+00> : vector<2xf32>
    %250 = vector.multi_reduction <add>, %249, %cst_80 [1] : vector<2x32xf32> to vector<2xf32>
    %251 = vector.shape_cast %250 : vector<2xf32> to vector<2x1xf32>
    %cst_81 = arith.constant 3.200000e+01 : f32
    %252 = vector.broadcast %cst_81 : f32 to vector<2x1xf32>
    %253 = arith.divf %251, %252 : vector<2x1xf32>
    %254 = vector.broadcast %253 : vector<2x1xf32> to vector<2x32xf32>
    %255 = arith.subf %249, %254 : vector<2x32xf32>
    %256 = arith.mulf %255, %255 : vector<2x32xf32>
    %cst_82 = arith.constant dense<0.000000e+00> : vector<2xf32>
    %257 = vector.multi_reduction <add>, %256, %cst_82 [1] : vector<2x32xf32> to vector<2xf32>
    %258 = vector.shape_cast %257 : vector<2xf32> to vector<2x1xf32>
    %cst_83 = arith.constant 3.200000e+01 : f32
    %259 = vector.broadcast %cst_83 : f32 to vector<2x1xf32>
    %260 = arith.divf %258, %259 : vector<2x1xf32>
    %261 = vector.broadcast %253 : vector<2x1xf32> to vector<2x32xf32>
    %262 = arith.subf %249, %261 : vector<2x32xf32>
    %cst_84 = arith.constant 9.99999997E-7 : f32
    %263 = vector.broadcast %cst_84 : f32 to vector<2x1xf32>
    %264 = arith.addf %260, %263 : vector<2x1xf32>
    %265 = math.rsqrt %264 : vector<2x1xf32>
    %266 = vector.broadcast %265 : vector<2x1xf32> to vector<2x32xf32>
    %267 = arith.mulf %262, %266 : vector<2x32xf32>
    %268 = vector.broadcast %2 : vector<1x32xf32> to vector<2x32xf32>
    %269 = arith.mulf %267, %268 : vector<2x32xf32>
    %270 = vector.broadcast %3 : vector<1x32xf32> to vector<2x32xf32>
    %271 = arith.addf %269, %270 : vector<2x32xf32>
    %c0_85 = arith.constant 0 : index
    %c0_86 = arith.constant 0 : index
    %272 = vector.load %arg11[%c0_85, %c0_86] : memref<2x32xf32, #tpu.memory_space<vmem>>, vector<2x32xf32>
    tpu.vector_store %arg11[%c0_85, %c0_86], %271 {strides = array<i32>} : memref<2x32xf32, #tpu.memory_space<vmem>>, vector<2x32xf32>,
    return
  }
  func.func @transform_0(%arg0: i32) -> (i32, i32) {
    %c0_i32 = arith.constant 0 : i32
    %c0_i32_0 = arith.constant 0 : i32
    %c0_i32_1 = arith.constant 0 : i32
    return %c0_i32, %c0_i32_0 : i32, i32
  }
  func.func @transform_1(%arg0: i32) -> (i32, i32) {
    %c0_i32 = arith.constant 0 : i32
    %c0_i32_0 = arith.constant 0 : i32
    %c0_i32_1 = arith.constant 0 : i32
    return %c0_i32, %c0_i32_0 : i32, i32
  }
  func.func @transform_2(%arg0: i32) -> (i32, i32) {
    %c0_i32 = arith.constant 0 : i32
    %c0_i32_0 = arith.constant 0 : i32
    %c0_i32_1 = arith.constant 0 : i32
    return %c0_i32, %c0_i32_0 : i32, i32
  }
  func.func @transform_3(%arg0: i32) -> (i32, i32, i32) {
    %c0_i32 = arith.constant 0 : i32
    %c0_i32_0 = arith.constant 0 : i32
    %c0_i32_1 = arith.constant 0 : i32
    %c0_i32_2 = arith.constant 0 : i32
    return %c0_i32, %c0_i32_0, %c0_i32_1 : i32, i32, i32
  }
  func.func @transform_4(%arg0: i32) -> (i32, i32, i32) {
    %c0_i32 = arith.constant 0 : i32
    %c0_i32_0 = arith.constant 0 : i32
    %c0_i32_1 = arith.constant 0 : i32
    %c0_i32_2 = arith.constant 0 : i32
    return %c0_i32, %c0_i32_0, %c0_i32_1 : i32, i32, i32
  }
  func.func @transform_5(%arg0: i32) -> (i32, i32, i32) {
    %c0_i32 = arith.constant 0 : i32
    %c0_i32_0 = arith.constant 0 : i32
    %c0_i32_1 = arith.constant 0 : i32
    %c0_i32_2 = arith.constant 0 : i32
    return %c0_i32, %c0_i32_0, %c0_i32_1 : i32, i32, i32
  }
  func.func @transform_6(%arg0: i32) -> (i32, i32, i32) {
    %c0_i32 = arith.constant 0 : i32
    %c0_i32_0 = arith.constant 0 : i32
    %c0_i32_1 = arith.constant 0 : i32
    %c0_i32_2 = arith.constant 0 : i32
    return %c0_i32, %c0_i32_0, %c0_i32_1 : i32, i32, i32
  }
  func.func @transform_7(%arg0: i32) -> (i32, i32, i32) {
    %c0_i32 = arith.constant 0 : i32
    %c0_i32_0 = arith.constant 0 : i32
    %c0_i32_1 = arith.constant 0 : i32
    %c0_i32_2 = arith.constant 0 : i32
    return %c0_i32, %c0_i32_0, %c0_i32_1 : i32, i32, i32
  }
  func.func @transform_8(%arg0: i32) -> (i32, i32) {
    %c0_i32 = arith.constant 0 : i32
    %c0_i32_0 = arith.constant 0 : i32
    %c0_i32_1 = arith.constant 0 : i32
    return %c0_i32, %c0_i32_0 : i32, i32
  }
  func.func @transform_9(%arg0: i32) -> (i32, i32) {
    %c0_i32 = arith.constant 0 : i32
    %c0_i32_0 = arith.constant 0 : i32
    %c0_i32_1 = arith.constant 0 : i32
    return %c0_i32, %c0_i32_0 : i32, i32
  }
  func.func @transform_10(%arg0: i32) -> (i32, i32) {
    %c0_i32 = arith.constant 0 : i32
    %c0_i32_0 = arith.constant 0 : i32
    %c0_i32_1 = arith.constant 0 : i32
    return %c0_i32, %c0_i32_0 : i32, i32
  }
}

</mosaic_0001>

<llo_original>
// kernel: tile.9
$region0: #{tile.9}
  %s0 = inlined_call_operand.vmem [shape: f32[2,5,32], index: 0, kind: input, shape index: {}]
  %s1 = inlined_call_operand.vmem [shape: f32[10,32], index: 1, kind: output, shape index: {}]
  %v2 = vld [vmem:[%s0] sm:$0x1f]
  %vm3 = vcmask 261120
  %4 = vst.msk [vmem:[%s1] sm:$0x1f] %vm3, %v2
  %s5 = scalar_lea.vmem %s0, 8
  %v6 = vld [vmem:[%s5] sm:$0x1f]
  %vm7 = vcmask 261120
  %s8 = scalar_lea.vmem %s1, 5
  %9 = vst.msk [vmem:[%s8] sm:$0x1f] %vm7, %v6

// kernel: build_mix_vit_forward.1
$region0: #{build_mix_vit_forward.1}
  #allocation0 [shape = 'u32[]', space=smem, size = 0x4, offset = 0x4, fixed_abs, tag = 'smem constant byte address 0x4 - core index']
  #allocation1 [shape = 'u32[72,128]{1,0:T(1,128)}', space=vmem, size = 0x9000, scoped, tag = 'internal scratch']
  %s0 = inlined_call_operand.vmem [shape: f32[10,192], index: 0, kind: input, shape index: {}]
  %s1 = inlined_call_operand.vmem [shape: bf16[192,32], index: 1, kind: input, shape index: {}]
  %s2 = inlined_call_operand.vmem [shape: f32[12,32], index: 2, kind: input, shape index: {}]
  %s3 = inlined_call_operand.vmem [shape: f32[2,8,128], index: 3, kind: input, shape index: {}]
  %s4 = inlined_call_operand.vmem [shape: bf16[2,32,96], index: 4, kind: input, shape index: {}]
  %s5 = inlined_call_operand.vmem [shape: bf16[2,32,32], index: 5, kind: input, shape index: {}]
  %s6 = inlined_call_operand.vmem [shape: bf16[2,32,128], index: 6, kind: input, shape index: {}]
  %s7 = inlined_call_operand.vmem [shape: bf16[2,128,32], index: 7, kind: input, shape index: {}]
  %s8 = inlined_call_operand.vmem [shape: f32[40,32], index: 8, kind: input, shape index: {}]
  %s9 = inlined_call_operand.vmem [shape: f32[40,10], index: 9, kind: input, shape index: {}]
  %s10 = inlined_call_operand.hbm [shape: f32[2,32], index: 10, kind: output, shape index: {}]
  %s11 = sld [smem:[#allocation0]]
  $region50: #{build_mix_vit_forward.1} parent=0
    _
  %s13 = ssub.s32 1, %s11
  %s14 = scalar_select 0, %s13, %s11
  $region1: #{build_mix_vit_forward.1} parent=0
    #allocation2 [shape = 'u8[1024]{0}', space=vmem, size = 0x400, scoped, tag = 'output window, operand 0, single buffered']
    #allocation3 [shape = 's32[1]{0}', space=sflag, size = 0x4, scoped, tag = 'scoped memory for build_mix_vit_forward.1']
    %15 = vsyncpa [#allocation3], 0
    // Predicated region
    $region2: #{build_mix_vit_forward.1} parent=1 // pred_check
      _
    $region3: #{build_mix_vit_forward.1} parent=1 // pred_check_branch
      %17 = sbr.rel (0) target = $region5
    $region4: #{build_mix_vit_forward.1} parent=1 // pred_region
      _
    $region5: #{build_mix_vit_forward.1} parent=1 // pred_fallthru
      _
    // Predicated region
    $region6: #{build_mix_vit_forward.1} parent=1 // pred_check
      _
    $region7: #{build_mix_vit_forward.1} parent=1 // pred_check_branch
      %19 = sbr.rel (0) target = $region9
    $region8: #{build_mix_vit_forward.1} parent=1 // pred_region
      _
    $region9: #{build_mix_vit_forward.1} parent=1 // pred_fallthru
      _
    // Predicated region
    $region10: #{build_mix_vit_forward.1} parent=1 // pred_check
      _
    $region11: #{build_mix_vit_forward.1} parent=1 // pred_check_branch
      %21 = sbr.rel (0) target = $region13
    $region12: #{build_mix_vit_forward.1} parent=1 // pred_region
      _
    $region13: #{build_mix_vit_forward.1} parent=1 // pred_fallthru
      _
    // Predicated region
    $region14: #{build_mix_vit_forward.1} parent=1 // pred_check
      _
    $region15: #{build_mix_vit_forward.1} parent=1 // pred_check_branch
      %23 = sbr.rel (0) target = $region17
    $region16: #{build_mix_vit_forward.1} parent=1 // pred_region
      _
    $region17: #{build_mix_vit_forward.1} parent=1 // pred_fallthru
      _
    // Predicated region
    $region18: #{build_mix_vit_forward.1} parent=1 // pred_check
      _
    $region19: #{build_mix_vit_forward.1} parent=1 // pred_check_branch
      %25 = sbr.rel (0) target = $region21
    $region20: #{build_mix_vit_forward.1} parent=1 // pred_region
      _
    $region21: #{build_mix_vit_forward.1} parent=1 // pred_fallthru
      _
    // Predicated region
    $region22: #{build_mix_vit_forward.1} parent=1 // pred_check
      _
    $region23: #{build_mix_vit_forward.1} parent=1 // pred_check_branch
      %27 = sbr.rel (0) target = $region25
    $region24: #{build_mix_vit_forward.1} parent=1 // pred_region
      _
    $region25: #{build_mix_vit_forward.1} parent=1 // pred_fallthru
      _
    // Predicated region
    $region26: #{build_mix_vit_forward.1} parent=1 // pred_check
      _
    $region27: #{build_mix_vit_forward.1} parent=1 // pred_check_branch
      %29 = sbr.rel (0) target = $region29
    $region28: #{build_mix_vit_forward.1} parent=1 // pred_region
      _
    $region29: #{build_mix_vit_forward.1} parent=1 // pred_fallthru
      _
    // Predicated region
    $region30: #{build_mix_vit_forward.1} parent=1 // pred_check
      _
    $region31: #{build_mix_vit_forward.1} parent=1 // pred_check_branch
      %31 = sbr.rel (0) target = $region33
    $region32: #{build_mix_vit_forward.1} parent=1 // pred_region
      _
    $region33: #{build_mix_vit_forward.1} parent=1 // pred_fallthru
      _
    // Predicated region
    $region34: #{build_mix_vit_forward.1} parent=1 // pred_check
      _
    $region35: #{build_mix_vit_forward.1} parent=1 // pred_check_branch
      %33 = sbr.rel (0) target = $region37
    $region36: #{build_mix_vit_forward.1} parent=1 // pred_region
      _
    $region37: #{build_mix_vit_forward.1} parent=1 // pred_fallthru
      _
    // Predicated region
    $region38: #{build_mix_vit_forward.1} parent=1 // pred_check
      _
    $region39: #{build_mix_vit_forward.1} parent=1 // pred_check_branch
      %35 = sbr.rel (0) target = $region41
    $region40: #{build_mix_vit_forward.1} parent=1 // pred_region
      _
    $region41: #{build_mix_vit_forward.1} parent=1 // pred_fallthru
      _
    %v37 = vld [vmem:[%s2] sm:$0xff]
    %v38 = vld [vmem:[%s2 + $0x8] sm:$0xf]
    %v39 = vld [vmem:[%s8] sm:$0xff]
    %v40 = vld [vmem:[%s8 + $0x8] sm:$0xff]
    %v41 = vld [vmem:[%s8 + $0x10] sm:$0xff]
    %v42 = vld [vmem:[%s8 + $0x18] sm:$0xff]
    %v43 = vld [vmem:[%s8 + $0x20] sm:$0xff]
    %v44 = vld [vmem:[%s9] sm:$0xff]
    %v45 = vld [vmem:[%s9 + $0x8] sm:$0xff]
    %v46 = vld [vmem:[%s9 + $0x10] sm:$0xff]
    %v47 = vld [vmem:[%s9 + $0x18] sm:$0xff]
    %v48 = vld [vmem:[%s9 + $0x20] sm:$0xff]
    %v49 = vld [vmem:[%s0] sm:$0xff]
    %v50 = vld [vmem:[%s0 + $0x8] sm:$0xff]
    %v51 = vld [vmem:[%s0 + $0x10] sm:$0x3]
    %v52 = vld [vmem:[%s0 + $0x18] sm:$0x3]
    %v53 = vld [vmem:[%s1] sm:$0xf]
    %v54 = vld [vmem:[%s1 + $0x4] sm:$0xf]
    %v55 = vld [vmem:[%s1 + $0x8] sm:$0xf]
    %v56 = vld [vmem:[%s1 + $0xc] sm:$0xf]
    %v57 = vld [vmem:[%s1 + $0x10] sm:$0xf]
    %v58 = vld [vmem:[%s1 + $0x14] sm:$0xf]
    %v59 = vld [vmem:[%s1 + $0x18] sm:$0xf]
    %v60 = vld [vmem:[%s1 + $0x1c] sm:$0xf]
    %v61 = vld [vmem:[%s1 + $0x20] sm:$0xf]
    %v62 = vld [vmem:[%s1 + $0x24] sm:$0xf]
    %v63 = vld [vmem:[%s1 + $0x28] sm:$0xf]
    %v64 = vld [vmem:[%s1 + $0x2c] sm:$0xf]
    %v65 = vld [vmem:[%s1 + $0x30] sm:$0xf]
    %v66 = vld [vmem:[%s1 + $0x34] sm:$0xf]
    %v67 = vld [vmem:[%s1 + $0x38] sm:$0xf]
    %v68 = vld [vmem:[%s1 + $0x3c] sm:$0xf]
    %v69 = vld [vmem:[%s1 + $0x40] sm:$0xf]
    %v70 = vld [vmem:[%s1 + $0x44] sm:$0xf]
    %v71 = vld [vmem:[%s1 + $0x48] sm:$0xf]
    %v72 = vld [vmem:[%s1 + $0x4c] sm:$0xf]
    %v73 = vld [vmem:[%s1 + $0x50] sm:$0xf]
    %v74 = vld [vmem:[%s1 + $0x54] sm:$0xf]
    %v75 = vld [vmem:[%s1 + $0x58] sm:$0xf]
    %v76 = vld [vmem:[%s1 + $0x5c] sm:$0xf]
    %v77 = vpack.c.bf16 %v51, %v49
    %v78 = vpack.c.bf16 %v52, %v50
    %v103 = vunpack.c.l.b16 %v53
    %v104 = vunpack.c.l.b16 %v54
    %v105 = vunpack.c.l.b16 %v55
    %v106 = vunpack.c.l.b16 %v56
    %v107 = vunpack.c.l.b16 %v57
    %v108 = vunpack.c.l.b16 %v58
    %v109 = vunpack.c.l.b16 %v59
    %v110 = vunpack.c.l.b16 %v60
    %v111 = vunpack.c.l.b16 %v61
    %v112 = vunpack.c.l.b16 %v62
    %v113 = vunpack.c.l.b16 %v63
    %v114 = vunpack.c.l.b16 %v64
    %v115 = vunpack.c.l.b16 %v65
    %v116 = vunpack.c.l.b16 %v66
    %v117 = vunpack.c.l.b16 %v67
    %v118 = vunpack.c.l.b16 %v68
    %v119 = vunpack.c.l.b16 %v69
    %v120 = vunpack.c.l.b16 %v70
    %v121 = vunpack.c.l.b16 %v71
    %v122 = vunpack.c.l.b16 %v72
    %v123 = vunpack.c.l.b16 %v73
    %v124 = vunpack.c.l.b16 %v74
    %v125 = vunpack.c.l.b16 %v75
    %v126 = vunpack.c.l.b16 %v76
    %v127 = vpack.c.b16 %v104, %v103
    %v128 = vpack.c.b16 %v106, %v105
    %v129 = vpack.c.b16 %v108, %v107
    %v130 = vpack.c.b16 %v110, %v109
    %v131 = vpack.c.b16 %v112, %v111
    %v132 = vpack.c.b16 %v114, %v113
    %v133 = vpack.c.b16 %v116, %v115
    %v134 = vpack.c.b16 %v118, %v117
    %v135 = vpack.c.b16 %v120, %v119
    %v136 = vpack.c.b16 %v122, %v121
    %v137 = vpack.c.b16 %v124, %v123
    %v138 = vpack.c.b16 %v126, %v125
    %vm151 = vcmask 523264
    %v153 = vsel %vm151, %v78, 0
    %155 = vmatpush.bf16.msra.mxu0 %v134
    %156 = vmatpush.bf16.msra.mxu0 %v133
    %157 = vmatpush.bf16.msra.mxu0 %v132
    %158 = vmatpush.bf16.msra.mxu0 %v131
    %159 = vmatpush.bf16.msra.mxu0 %v130
    %160 = vmatpush.bf16.msra.mxu0 %v129
    %161 = vmatpush.bf16.msra.mxu0 %v128
    %162 = vmatpush.bf16.msra.mxu0 %v127
    %163 = vmatmul.bf16.gmra.mxu0 %v77
    %v164 = vpop.f32.mrf.mxu0
    %v165 = vadd.f32 %v37, %v164
    %v166 = vpop.f32.mrf.mxu0
    %v167 = vadd.f32 %v38, %v166
    %168 = vdwg.mxu0
    %169 = vmatpush.bf16.msra.mxu0 0
    %170 = vmatpush.bf16.msra.mxu0 0
    %171 = vmatpush.bf16.msra.mxu0 0
    %172 = vmatpush.bf16.msra.mxu0 0
    %173 = vmatpush.bf16.msra.mxu0 %v138
    %174 = vmatpush.bf16.msra.mxu0 %v137
    %175 = vmatpush.bf16.msra.mxu0 %v136
    %176 = vmatpush.bf16.msra.mxu0 %v135
    %177 = vmatmul.bf16.gmra.mxu0 %v153
    %v178 = vpop.f32.mrf.mxu0
    %v179 = vadd.f32 %v165, %v178
    %v180 = vpop.f32.mrf.mxu0
    %v181 = vadd.f32 %v167, %v180
    %182 = vdwg.mxu0
    %v183 = vld [vmem:[%s3] sm:$0xff]
    %vm184 = vcmask 261120
    %v185 = vsel %vm184, %v179, 0.0
    %186 = vadd.xlane.f32.xlu0 %v185
    %v187 = vpop.xlane.xlu0 %186
    %vm188 = vcmask 254976
    %v189 = vsel %vm188, %v181, 0.0
    %190 = vadd.xlane.f32.xlu0 %v189
    %v191 = vpop.xlane.xlu0 %190
    %v192 = vrcp.pop 32.0
    %v193 = vmul.f32 32.0, %v192
    %v194 = vsub.f32 1.0, %v193
    %v195 = vmul.f32 %v192, %v194
    %v196 = vadd.f32 %v192, %v195
    %vm197 = vweird.f32 %v192
    %v198 = vsel %vm197, %v192, %v196
    %v199 = vmul.f32 %v187, %v198
    %v200 = vmul.f32 %v191, %v198
    %v201 = vsub.f32 %v179, %v199
    %v202 = vsub.f32 %v181, %v200
    %v203 = vmul.f32 %v201, %v201
    %v204 = vmul.f32 %v202, %v202
    %v205 = vsel %vm184, %v203, 0.0
    %206 = vadd.xlane.f32.xlu0 %v205
    %v207 = vpop.xlane.xlu0 %206
    %v208 = vsel %vm188, %v204, 0.0
    %209 = vadd.xlane.f32.xlu0 %v208
    %v210 = vpop.xlane.xlu0 %209
    %v211 = vmul.f32 %v207, %v198
    %v212 = vmul.f32 %v210, %v198
    %v213 = vadd.f32 %v211, 1e-06
    %v214 = vadd.f32 %v212, 1e-06
    %v215 = vrsqrt.pop %v213
    %v216 = vmul.f32 %v215, %v213
    %v217 = vmul.f32 %v216, %v215
    %v218 = vmul.f32 0.5, %v217
    %v219 = vsub.f32 1.5, %v218
    %v220 = vmul.f32 %v215, %v219
    %vm221 = vweird.f32 %v213
    %vm222 = vweird.f32 %v215
    %vm223 = vmor %vm221, %vm222
    %v224 = vsel %vm223, %v215, %v220
    %v225 = vrsqrt.pop %v214
    %v226 = vmul.f32 %v225, %v214
    %v227 = vmul.f32 %v226, %v225
    %v228 = vmul.f32 0.5, %v227
    %v229 = vsub.f32 1.5, %v228
    %v230 = vmul.f32 %v225, %v229
    %vm231 = vweird.f32 %v214
    %vm232 = vweird.f32 %v225
    %vm233 = vmor %vm231, %vm232
    %v234 = vsel %vm233, %v225, %v230
    %v235 = vmul.f32 %v201, %v224
    %v236 = vmul.f32 %v202, %v234
    %v237 = vperm.slane %v183, 0
    %v238 = vmul.f32 %v235, %v237
    %v239 = vmul.f32 %v236, %v237
    %v240 = vperm.slane %v183, 1
    %v241 = vadd.f32 %v238, %v240
    %v242 = vadd.f32 %v239, %v240
    %v243 = vld [vmem:[%s4] sm:$0xf]
    %v244 = vld [vmem:[%s4 + $0x4] sm:$0xf]
    %v245 = vld [vmem:[%s4 + $0x8] sm:$0xf]
    %v246 = vld [vmem:[%s4 + $0xc] sm:$0xf]
    %v247 = vpack.c.bf16 %v242, %v241
    %v248 = vperm.slane %v183, 2
    %v253 = vunpack.c.l.b16 %v243
    %v254 = vunpack.c.l.b16 %v244
    %v255 = vunpack.c.l.b16 %v245
    %v256 = vunpack.c.l.b16 %v246
    %v257 = vpack.c.b16 %v254, %v253
    %v258 = vpack.c.b16 %v256, %v255
    %v262 = vsel %vm184, %v247, 0
    %264 = vmatpush.bf16.msra.mxu0 0
    %265 = vmatpush.bf16.msra.mxu0 0
    %266 = vmatpush.bf16.msra.mxu0 0
    %267 = vmatpush.bf16.msra.mxu0 0
    %268 = vmatpush.bf16.msra.mxu0 0
    %269 = vmatpush.bf16.msra.mxu0 0
    %270 = vmatpush.bf16.msra.mxu0 %v258
    %271 = vmatpush.bf16.msra.mxu0 %v257
    %272 = vmatmul.bf16.gmra.mxu0 %v262
    %v273 = vpop.f32.mrf.mxu0
    %v274 = vadd.f32 %v248, %v273
    %v275 = vpop.f32.mrf.mxu0
    %v276 = vadd.f32 %v248, %v275
    %277 = vdwg.mxu0
    %vm280 = vcmask 1041408
    %v281 = vrot.slane %v274, 6
    %v282 = vrot.slane %v276, 6
    %v283 = vsel %vm280, %v281, %v282
    %vm286 = vcmask 1043456
    %v287 = vrot.slane %v274, 4
    %v288 = vrot.slane %v276, 4
    %v289 = vsel %vm286, %v287, %v288
    %vm292 = vcmask 1045504
    %v293 = vrot.slane %v274, 2
    %v294 = vrot.slane %v276, 2
    %v295 = vsel %vm292, %v293, %v294
    %v298 = vsel %vm280, %v276, %v281
    %v299 = vsel %vm286, %v283, %v287
    %v300 = vsel %vm292, %v289, %v293
    %v301 = vmul.f32 %v274, %v39
    %v302 = vmul.f32 %v298, %v40
    %v303 = vmul.f32 %v299, %v41
    %v304 = vmul.f32 %v300, %v42
    %v305 = vmul.f32 %v295, %v43
    %v306 = vpack.c.bf16 %v302, %v301
    %v307 = vpack.c.bf16 %v304, %v303
    %v308 = vpack.c.bf16 %v305, %v305
    %v309 = vpack.c.bf16 %v276, %v274
    %311 = vrot.lane.b32.xlu0 %v309, 96
    %v312 = vpop.permute.xlu0 %311
    %v314 = vsel %vm184, %v306, 0
    %v317 = vsel %vm184, %v307, 0
    %v320 = vsel %vm184, %v308, 0
    %v323 = vsel %vm184, %v312, 0
    %325 = vmatpush.bf16.xpose.msra.mxu0 0
    %326 = vmatpush.bf16.xpose.msra.mxu0 0
    %327 = vmatpush.bf16.xpose.msra.mxu0 0
    %328 = vmatpush.bf16.xpose.msra.mxu0 0
    %329 = vmatpush.bf16.xpose.msra.mxu0 0
    %330 = vmatpush.bf16.xpose.msra.mxu0 0
    %331 = vmatpush.bf16.xpose.msra.mxu0 0
    %332 = vmatpush.bf16.xpose.msra.mxu0 %v323
    %333 = vmatmul.bf16.gmra.mxu0 %v314
    %v334 = vpop.f32.mrf.mxu0
    %v335 = vadd.f32 %v44, %v334
    %v336 = vpop.f32.mrf.mxu0
    %v337 = vadd.f32 %v45, %v336
    %338 = vmatmul.bf16.gmra.mxu0 %v317
    %v339 = vpop.f32.mrf.mxu0
    %v340 = vadd.f32 %v46, %v339
    %v341 = vpop.f32.mrf.mxu0
    %v342 = vadd.f32 %v47, %v341
    %343 = vmatmul.bf16.gmra.mxu0 %v320
    %v344 = vpop.f32.mrf.mxu0
    %v345 = vadd.f32 %v48, %v344
    %v346 = vpop.f32.mrf.mxu0
    %347 = vdwg.mxu0
    %vm348 = vcmask 80896
    %v349 = vsel %vm348, %v335, -inf
    %350 = vmax.xlane.f32.xlu0 %v349
    %v351 = vpop.xlane.xlu0 %350
    %v352 = vsel %vm348, %v337, -inf
    %353 = vmax.xlane.f32.xlu0 %v352
    %v354 = vpop.xlane.xlu0 %353
    %v355 = vsel %vm348, %v340, -inf
    %356 = vmax.xlane.f32.xlu0 %v355
    %v357 = vpop.xlane.xlu0 %356
    %v358 = vsel %vm348, %v342, -inf
    %359 = vmax.xlane.f32.xlu0 %v358
    %v360 = vpop.xlane.xlu0 %359
    %v361 = vsel %vm348, %v345, -inf
    %362 = vmax.xlane.f32.xlu0 %v361
    %v363 = vpop.xlane.xlu0 %362
    %v364 = vsub.f32 %v335, %v351
    %v365 = vsub.f32 %v337, %v354
    %v366 = vsub.f32 %v340, %v357
    %v367 = vsub.f32 %v342, %v360
    %v368 = vsub.f32 %v345, %v363
    %v369 = vmul.f32 %v364, 1.442695
    %v370 = vpow.pop %v369
    %v371 = vmul.f32 %v365, 1.442695
    %v372 = vpow.pop %v371
    %v373 = vmul.f32 %v366, 1.442695
    %v374 = vpow.pop %v373
    %v375 = vmul.f32 %v367, 1.442695
    %v376 = vpow.pop %v375
    %v377 = vmul.f32 %v368, 1.442695
    %v378 = vpow.pop %v377
    %v379 = vsel %vm348, %v370, 0.0
    %380 = vadd.xlane.f32.xlu0 %v379
    %v381 = vpop.xlane.xlu0 %380
    %v382 = vsel %vm348, %v372, 0.0
    %383 = vadd.xlane.f32.xlu0 %v382
    %v384 = vpop.xlane.xlu0 %383
    %v385 = vsel %vm348, %v374, 0.0
    %386 = vadd.xlane.f32.xlu0 %v385
    %v387 = vpop.xlane.xlu0 %386
    %v388 = vsel %vm348, %v376, 0.0
    %389 = vadd.xlane.f32.xlu0 %v388
    %v390 = vpop.xlane.xlu0 %389
    %v391 = vsel %vm348, %v378, 0.0
    %392 = vadd.xlane.f32.xlu0 %v391
    %v393 = vpop.xlane.xlu0 %392
    %v394 = vrcp.pop %v381
    %v395 = vrcp.pop %v384
    %v396 = vrcp.pop %v387
    %v397 = vrcp.pop %v390
    %v398 = vrcp.pop %v393
    %v399 = vmul.f32 %v370, %v394
    %v400 = vmul.f32 %v372, %v395
    %v401 = vmul.f32 %v374, %v396
    %v402 = vmul.f32 %v376, %v397
    %v403 = vmul.f32 %v378, %v398
    %v404 = vpack.c.bf16 %v400, %v399
    %v405 = vpack.c.bf16 %v402, %v401
    %v406 = vpack.c.bf16 %v403, %v403
    %407 = vrot.lane.b32.xlu0 %v309, 64
    %v408 = vpop.permute.xlu0 %407
    %v410 = vsel %vm348, %v404, 0
    %v413 = vsel %vm348, %v405, 0
    %v416 = vsel %vm348, %v406, 0
    %vm418 = vcmask 1044480
    %v420 = vsel %vm418, %v408, 0
    %422 = vmatpush.bf16.msra.mxu0 0
    %423 = vmatpush.bf16.msra.mxu0 0
    %424 = vmatpush.bf16.msra.mxu0 0
    %425 = vmatpush.bf16.msra.mxu0 0
    %426 = vmatpush.bf16.msra.mxu0 0
    %427 = vmatpush.bf16.msra.mxu0 0
    %428 = vmatpush.bf16.msra.mxu0 0
    %429 = vmatpush.bf16.msra.mxu0 %v420
    %430 = vmatmul.bf16.gmra.mxu0 %v410
    %v431 = vpop.f32.mrf.mxu0
    %v432 = vadd.f32 0.0, %v431
    %v433 = vpop.f32.mrf.mxu0
    %v434 = vadd.f32 0.0, %v433
    %435 = vmatmul.bf16.gmra.mxu0 %v413
    %v436 = vpop.f32.mrf.mxu0
    %v437 = vadd.f32 0.0, %v436
    %v438 = vpop.f32.mrf.mxu0
    %v439 = vadd.f32 0.0, %v438
    %440 = vmatmul.bf16.gmra.mxu0 %v416
    %v441 = vpop.f32.mrf.mxu0
    %v442 = vadd.f32 0.0, %v441
    %v443 = vpop.f32.mrf.mxu0
    %444 = vdwg.mxu0
    %v445 = vmul.f32 %v432, %v39
    %v446 = vmul.f32 %v434, %v40
    %v447 = vmul.f32 %v437, %v41
    %v448 = vmul.f32 %v439, %v42
    %v449 = vmul.f32 %v442, %v43
    %v452 = vrot.slane %v446, 2
    %v453 = vrot.slane %v447, 2
    %v454 = vsel %vm292, %v452, %v453
    %v457 = vadd.f32 %v445, %v454
    %v458 = vadd.f32 %v446, %v453
    %v460 = vrot.slane %v447, 4
    %v461 = vrot.slane %v448, 4
    %v462 = vsel %vm286, %v460, %v461
    %v465 = vadd.f32 %v457, %v462
    %v466 = vadd.f32 %v458, %v461
    %v468 = vrot.slane %v448, 6
    %v469 = vrot.slane %v449, 6
    %v470 = vsel %vm280, %v468, %v469
    %v473 = vadd.f32 %v465, %v470
    %v474 = vadd.f32 %v466, %v469
    %v475 = vld [vmem:[%s5] sm:$0xf]
    %v476 = vld [vmem:[%s5 + $0x4] sm:$0xf]
    %v477 = vld [vmem:[%s5 + $0x8] sm:$0xf]
    %v478 = vld [vmem:[%s5 + $0xc] sm:$0xf]
    %v479 = vpack.c.bf16 %v474, %v473
    %v484 = vunpack.c.l.b16 %v475
    %v485 = vunpack.c.l.b16 %v476
    %v486 = vunpack.c.l.b16 %v477
    %v487 = vunpack.c.l.b16 %v478
    %v488 = vpack.c.b16 %v485, %v484
    %v489 = vpack.c.b16 %v487, %v486
    %v493 = vsel %vm184, %v479, 0
    %495 = vmatpush.bf16.msra.mxu0 0
    %496 = vmatpush.bf16.msra.mxu0 0
    %497 = vmatpush.bf16.msra.mxu0 0
    %498 = vmatpush.bf16.msra.mxu0 0
    %499 = vmatpush.bf16.msra.mxu0 0
    %500 = vmatpush.bf16.msra.mxu0 0
    %501 = vmatpush.bf16.msra.mxu0 %v489
    %502 = vmatpush.bf16.msra.mxu0 %v488
    %503 = vmatmul.bf16.gmra.mxu0 %v493
    %v504 = vpop.f32.mrf.mxu0
    %v505 = vadd.f32 0.0, %v504
    %v506 = vpop.f32.mrf.mxu0
    %v507 = vadd.f32 0.0, %v506
    %508 = vdwg.mxu0
    %v509 = vadd.f32 %v179, %v505
    %v510 = vadd.f32 %v181, %v507
    %v511 = vperm.slane %v183, 3
    %v512 = vadd.f32 %v509, %v511
    %v513 = vadd.f32 %v510, %v511
    %v514 = vsel %vm184, %v512, 0.0
    %515 = vadd.xlane.f32.xlu0 %v514
    %v516 = vpop.xlane.xlu0 %515
    %v517 = vsel %vm188, %v513, 0.0
    %518 = vadd.xlane.f32.xlu0 %v517
    %v519 = vpop.xlane.xlu0 %518
    %v520 = vmul.f32 %v516, %v198
    %v521 = vmul.f32 %v519, %v198
    %v522 = vsub.f32 %v512, %v520
    %v523 = vsub.f32 %v513, %v521
    %v524 = vmul.f32 %v522, %v522
    %v525 = vmul.f32 %v523, %v523
    %v526 = vsel %vm184, %v524, 0.0
    %527 = vadd.xlane.f32.xlu0 %v526
    %v528 = vpop.xlane.xlu0 %527
    %v529 = vsel %vm188, %v525, 0.0
    %530 = vadd.xlane.f32.xlu0 %v529
    %v531 = vpop.xlane.xlu0 %530
    %v532 = vmul.f32 %v528, %v198
    %v533 = vmul.f32 %v531, %v198
    %v534 = vadd.f32 %v532, 1e-06
    %v535 = vadd.f32 %v533, 1e-06
    %v536 = vrsqrt.pop %v534
    %v537 = vmul.f32 %v536, %v534
    %v538 = vmul.f32 %v537, %v536
    %v539 = vmul.f32 0.5, %v538
    %v540 = vsub.f32 1.5, %v539
    %v541 = vmul.f32 %v536, %v540
    %vm542 = vweird.f32 %v534
    %vm543 = vweird.f32 %v536
    %vm544 = vmor %vm542, %vm543
    %v545 = vsel %vm544, %v536, %v541
    %v546 = vrsqrt.pop %v535
    %v547 = vmul.f32 %v546, %v535
    %v548 = vmul.f32 %v547, %v546
    %v549 = vmul.f32 0.5, %v548
    %v550 = vsub.f32 1.5, %v549
    %v551 = vmul.f32 %v546, %v550
    %vm552 = vweird.f32 %v535
    %vm553 = vweird.f32 %v546
    %vm554 = vmor %vm552, %vm553
    %v555 = vsel %vm554, %v546, %v551
    %v556 = vmul.f32 %v522, %v545
    %v557 = vmul.f32 %v523, %v555
    %v558 = vperm.slane %v183, 4
    %v559 = vmul.f32 %v556, %v558
    %v560 = vmul.f32 %v557, %v558
    %v561 = vperm.slane %v183, 5
    %v562 = vadd.f32 %v559, %v561
    %v563 = vadd.f32 %v560, %v561
    %v564 = vld [vmem:[%s6] sm:$0xf]
    %v565 = vld [vmem:[%s6 + $0x4] sm:$0xf]
    %v566 = vld [vmem:[%s6 + $0x8] sm:$0xf]
    %v567 = vld [vmem:[%s6 + $0xc] sm:$0xf]
    %v568 = vpack.c.bf16 %v563, %v562
    %v569 = vperm.slane %v183, 6
    %v574 = vunpack.c.l.b16 %v564
    %v575 = vunpack.c.l.b16 %v565
    %v576 = vunpack.c.l.b16 %v566
    %v577 = vunpack.c.l.b16 %v567
    %v578 = vpack.c.b16 %v575, %v574
    %v579 = vpack.c.b16 %v577, %v576
    %v583 = vsel %vm184, %v568, 0
    %585 = vmatpush.bf16.msra.mxu0 0
    %586 = vmatpush.bf16.msra.mxu0 0
    %587 = vmatpush.bf16.msra.mxu0 0
    %588 = vmatpush.bf16.msra.mxu0 0
    %589 = vmatpush.bf16.msra.mxu0 0
    %590 = vmatpush.bf16.msra.mxu0 0
    %591 = vmatpush.bf16.msra.mxu0 %v579
    %592 = vmatpush.bf16.msra.mxu0 %v578
    %593 = vmatmul.bf16.gmra.mxu0 %v583
    %v594 = vpop.f32.mrf.mxu0
    %v595 = vadd.f32 %v569, %v594
    %v596 = vpop.f32.mrf.mxu0
    %v597 = vadd.f32 %v569, %v596
    %598 = vdwg.mxu0
    %v599 = vmul.f32 %v595, 0.5
    %v600 = vmul.f32 %v597, 0.5
    %v601 = vmul.f32 %v595, 0.70710677
    %v602 = vmul.f32 %v597, 0.70710677
    %v603 = vmul.f32 %v601, %v601
    %v604 = vmin.f32 16.0, %v603
    %v605 = vmul.f32 %v604, 2.1237322e-06
    %v606 = vadd.f32 %v605, 0.00028619796
    %v607 = vmul.f32 %v604, %v606
    %v608 = vadd.f32 %v607, 0.0036580483
    %v609 = vmul.f32 %v604, %v608
    %v610 = vadd.f32 %v609, 0.05243302
    %v611 = vmul.f32 %v604, %v610
    %v612 = vadd.f32 %v611, 0.18741608
    %v613 = vmul.f32 %v604, %v612
    %v614 = vadd.f32 %v613, 1.1283791
    %v615 = vmul.f32 %v601, %v614
    %v616 = vmul.f32 %v604, 3.8918573e-05
    %v617 = vadd.f32 %v616, 0.001143296
    %v618 = vmul.f32 %v604, %v617
    %v619 = vadd.f32 %v618, 0.014752088
    %v620 = vmul.f32 %v604, %v619
    %v621 = vadd.f32 %v620, 0.112945676
    %v622 = vmul.f32 %v604, %v621
    %v623 = vadd.f32 %v622, 0.4994258
    %v624 = vmul.f32 %v604, %v623
    %v625 = vadd.f32 %v624, 1.0
    %v626 = vrcp.pop %v625
    %v627 = vmul.f32 %v625, %v626
    %v628 = vsub.f32 1.0, %v627
    %v629 = vmul.f32 %v626, %v628
    %v630 = vadd.f32 %v626, %v629
    %vm631 = vweird.f32 %v625
    %vm632 = vweird.f32 %v626
    %vm633 = vmor %vm631, %vm632
    %v634 = vsel %vm633, %v626, %v630
    %v635 = vand.u32 2147483647, %v625
    %vm636 = vcmp.eq.f32.partialorder %v635, 8.507059e+37
    %v637 = vand.u32 %v625, 2147483648
    %v638 = vor.u32 1.1754944e-38, %v637
    %v639 = vsel %vm636, %v638, %v634
    %v640 = vmul.f32 %v615, %v639
    %v641 = vmin.f32 %v640, 1.0
    %v642 = vmax.f32 %v641, -1.0
    %v643 = vmul.f32 %v602, %v602
    %v644 = vmin.f32 16.0, %v643
    %v645 = vmul.f32 %v644, 2.1237322e-06
    %v646 = vadd.f32 %v645, 0.00028619796
    %v647 = vmul.f32 %v644, %v646
    %v648 = vadd.f32 %v647, 0.0036580483
    %v649 = vmul.f32 %v644, %v648
    %v650 = vadd.f32 %v649, 0.05243302
    %v651 = vmul.f32 %v644, %v650
    %v652 = vadd.f32 %v651, 0.18741608
    %v653 = vmul.f32 %v644, %v652
    %v654 = vadd.f32 %v653, 1.1283791
    %v655 = vmul.f32 %v602, %v654
    %v656 = vmul.f32 %v644, 3.8918573e-05
    %v657 = vadd.f32 %v656, 0.001143296
    %v658 = vmul.f32 %v644, %v657
    %v659 = vadd.f32 %v658, 0.014752088
    %v660 = vmul.f32 %v644, %v659
    %v661 = vadd.f32 %v660, 0.112945676
    %v662 = vmul.f32 %v644, %v661
    %v663 = vadd.f32 %v662, 0.4994258
    %v664 = vmul.f32 %v644, %v663
    %v665 = vadd.f32 %v664, 1.0
    %v666 = vrcp.pop %v665
    %v667 = vmul.f32 %v665, %v666
    %v668 = vsub.f32 1.0, %v667
    %v669 = vmul.f32 %v666, %v668
    %v670 = vadd.f32 %v666, %v669
    %vm671 = vweird.f32 %v665
    %vm672 = vweird.f32 %v666
    %vm673 = vmor %vm671, %vm672
    %v674 = vsel %vm673, %v666, %v670
    %v675 = vand.u32 2147483647, %v665
    %vm676 = vcmp.eq.f32.partialorder %v675, 8.507059e+37
    %v677 = vand.u32 %v665, 2147483648
    %v678 = vor.u32 1.1754944e-38, %v677
    %v679 = vsel %vm676, %v678, %v674
    %v680 = vmul.f32 %v655, %v679
    %v681 = vmin.f32 %v680, 1.0
    %v682 = vmax.f32 %v681, -1.0
    %v683 = vadd.f32 %v642, 1.0
    %v684 = vadd.f32 %v682, 1.0
    %v685 = vmul.f32 %v599, %v683
    %v686 = vmul.f32 %v600, %v684
    %v687 = vld [vmem:[%s7] sm:$0xf]
    %v688 = vld [vmem:[%s7 + $0x4] sm:$0xf]
    %v689 = vld [vmem:[%s7 + $0x8] sm:$0xf]
    %v690 = vld [vmem:[%s7 + $0xc] sm:$0xf]
    %v691 = vld [vmem:[%s7 + $0x10] sm:$0xf]
    %v692 = vld [vmem:[%s7 + $0x14] sm:$0xf]
    %v693 = vld [vmem:[%s7 + $0x18] sm:$0xf]
    %v694 = vld [vmem:[%s7 + $0x1c] sm:$0xf]
    %v695 = vld [vmem:[%s7 + $0x20] sm:$0xf]
    %v696 = vld [vmem:[%s7 + $0x24] sm:$0xf]
    %v697 = vld [vmem:[%s7 + $0x28] sm:$0xf]
    %v698 = vld [vmem:[%s7 + $0x2c] sm:$0xf]
    %v699 = vld [vmem:[%s7 + $0x30] sm:$0xf]
    %v700 = vld [vmem:[%s7 + $0x34] sm:$0xf]
    %v701 = vld [vmem:[%s7 + $0x38] sm:$0xf]
    %v702 = vld [vmem:[%s7 + $0x3c] sm:$0xf]
    %v703 = vpack.c.bf16 %v686, %v685
    %v720 = vunpack.c.l.b16 %v687
    %v721 = vunpack.c.l.b16 %v688
    %v722 = vunpack.c.l.b16 %v689
    %v723 = vunpack.c.l.b16 %v690
    %v724 = vunpack.c.l.b16 %v691
    %v725 = vunpack.c.l.b16 %v692
    %v726 = vunpack.c.l.b16 %v693
    %v727 = vunpack.c.l.b16 %v694
    %v728 = vunpack.c.l.b16 %v695
    %v729 = vunpack.c.l.b16 %v696
    %v730 = vunpack.c.l.b16 %v697
    %v731 = vunpack.c.l.b16 %v698
    %v732 = vunpack.c.l.b16 %v699
    %v733 = vunpack.c.l.b16 %v700
    %v734 = vunpack.c.l.b16 %v701
    %v735 = vunpack.c.l.b16 %v702
    %v736 = vpack.c.b16 %v721, %v720
    %v737 = vpack.c.b16 %v723, %v722
    %v738 = vpack.c.b16 %v725, %v724
    %v739 = vpack.c.b16 %v727, %v726
    %v740 = vpack.c.b16 %v729, %v728
    %v741 = vpack.c.b16 %v731, %v730
    %v742 = vpack.c.b16 %v733, %v732
    %v743 = vpack.c.b16 %v735, %v734
    %752 = vmatpush.bf16.msra.mxu0 %v743
    %753 = vmatpush.bf16.msra.mxu0 %v742
    %754 = vmatpush.bf16.msra.mxu0 %v741
    %755 = vmatpush.bf16.msra.mxu0 %v740
    %756 = vmatpush.bf16.msra.mxu0 %v739
    %757 = vmatpush.bf16.msra.mxu0 %v738
    %758 = vmatpush.bf16.msra.mxu0 %v737
    %759 = vmatpush.bf16.msra.mxu0 %v736
    %760 = vmatmul.bf16.gmra.mxu0 %v703
    %v761 = vpop.f32.mrf.mxu0
    %v762 = vadd.f32 0.0, %v761
    %v763 = vpop.f32.mrf.mxu0
    %v764 = vadd.f32 0.0, %v763
    %765 = vdwg.mxu0
    %v766 = vadd.f32 %v512, %v762
    %v767 = vadd.f32 %v513, %v764
    %v768 = vperm.slane %v183, 7
    %v769 = vadd.f32 %v766, %v768
    %v770 = vadd.f32 %v767, %v768
    %s771 = scalar_lea.vmem %s3, 8
    %v772 = vld [vmem:[%s771] sm:$0xff]
    %v773 = vsel %vm184, %v769, 0.0
    %774 = vadd.xlane.f32.xlu0 %v773
    %v775 = vpop.xlane.xlu0 %774
    %v776 = vsel %vm188, %v770, 0.0
    %777 = vadd.xlane.f32.xlu0 %v776
    %v778 = vpop.xlane.xlu0 %777
    %v779 = vmul.f32 %v775, %v198
    %v780 = vmul.f32 %v778, %v198
    %v781 = vsub.f32 %v769, %v779
    %v782 = vsub.f32 %v770, %v780
    %v783 = vmul.f32 %v781, %v781
    %v784 = vmul.f32 %v782, %v782
    %v785 = vsel %vm184, %v783, 0.0
    %786 = vadd.xlane.f32.xlu0 %v785
    %v787 = vpop.xlane.xlu0 %786
    %v788 = vsel %vm188, %v784, 0.0
    %789 = vadd.xlane.f32.xlu0 %v788
    %v790 = vpop.xlane.xlu0 %789
    %v791 = vmul.f32 %v787, %v198
    %v792 = vmul.f32 %v790, %v198
    %v793 = vadd.f32 %v791, 1e-06
    %v794 = vadd.f32 %v792, 1e-06
    %v795 = vrsqrt.pop %v793
    %v796 = vmul.f32 %v795, %v793
    %v797 = vmul.f32 %v796, %v795
    %v798 = vmul.f32 0.5, %v797
    %v799 = vsub.f32 1.5, %v798
    %v800 = vmul.f32 %v795, %v799
    %vm801 = vweird.f32 %v793
    %vm802 = vweird.f32 %v795
    %vm803 = vmor %vm801, %vm802
    %v804 = vsel %vm803, %v795, %v800
    %v805 = vrsqrt.pop %v794
    %v806 = vmul.f32 %v805, %v794
    %v807 = vmul.f32 %v806, %v805
    %v808 = vmul.f32 0.5, %v807
    %v809 = vsub.f32 1.5, %v808
    %v810 = vmul.f32 %v805, %v809
    %vm811 = vweird.f32 %v794
    %vm812 = vweird.f32 %v805
    %vm813 = vmor %vm811, %vm812
    %v814 = vsel %vm813, %v805, %v810
    %v815 = vmul.f32 %v781, %v804
    %v816 = vmul.f32 %v782, %v814
    %v817 = vperm.slane %v772, 0
    %v818 = vmul.f32 %v815, %v817
    %v819 = vmul.f32 %v816, %v817
    %v820 = vperm.slane %v772, 1
    %v821 = vadd.f32 %v818, %v820
    %v822 = vadd.f32 %v819, %v820
    %s823 = scalar_lea.vmem %s4, 16
    %v824 = vld [vmem:[%s823] sm:$0xf]
    %v825 = vld [vmem:[%s823 + $0x4] sm:$0xf]
    %v826 = vld [vmem:[%s823 + $0x8] sm:$0xf]
    %v827 = vld [vmem:[%s823 + $0xc] sm:$0xf]
    %v828 = vpack.c.bf16 %v822, %v821
    %v829 = vperm.slane %v772, 2
    %v834 = vunpack.c.l.b16 %v824
    %v835 = vunpack.c.l.b16 %v825
    %v836 = vunpack.c.l.b16 %v826
    %v837 = vunpack.c.l.b16 %v827
    %v838 = vpack.c.b16 %v835, %v834
    %v839 = vpack.c.b16 %v837, %v836
    %v843 = vsel %vm184, %v828, 0
    %845 = vmatpush.bf16.msra.mxu0 0
    %846 = vmatpush.bf16.msra.mxu0 0
    %847 = vmatpush.bf16.msra.mxu0 0
    %848 = vmatpush.bf16.msra.mxu0 0
    %849 = vmatpush.bf16.msra.mxu0 0
    %850 = vmatpush.bf16.msra.mxu0 0
    %851 = vmatpush.bf16.msra.mxu0 %v839
    %852 = vmatpush.bf16.msra.mxu0 %v838
    %853 = vmatmul.bf16.gmra.mxu0 %v843
    %v854 = vpop.f32.mrf.mxu0
    %v855 = vadd.f32 %v829, %v854
    %v856 = vpop.f32.mrf.mxu0
    %v857 = vadd.f32 %v829, %v856
    %858 = vdwg.mxu0
    %v861 = vrot.slane %v855, 6
    %v862 = vrot.slane %v857, 6
    %v863 = vsel %vm280, %v861, %v862
    %v866 = vrot.slane %v855, 4
    %v867 = vrot.slane %v857, 4
    %v868 = vsel %vm286, %v866, %v867
    %v871 = vrot.slane %v855, 2
    %v872 = vrot.slane %v857, 2
    %v873 = vsel %vm292, %v871, %v872
    %v876 = vsel %vm280, %v857, %v861
    %v877 = vsel %vm286, %v863, %v866
    %v878 = vsel %vm292, %v868, %v871
    %v879 = vmul.f32 %v855, %v39
    %v880 = vmul.f32 %v876, %v40
    %v881 = vmul.f32 %v877, %v41
    %v882 = vmul.f32 %v878, %v42
    %v883 = vmul.f32 %v873, %v43
    %v884 = vpack.c.bf16 %v880, %v879
    %v885 = vpack.c.bf16 %v882, %v881
    %v886 = vpack.c.bf16 %v883, %v883
    %v887 = vpack.c.bf16 %v857, %v855
    %889 = vrot.lane.b32.xlu0 %v887, 96
    %v890 = vpop.permute.xlu0 %889
    %v892 = vsel %vm184, %v884, 0
    %v895 = vsel %vm184, %v885, 0
    %v898 = vsel %vm184, %v886, 0
    %v901 = vsel %vm184, %v890, 0
    %903 = vmatpush.bf16.xpose.msra.mxu0 0
    %904 = vmatpush.bf16.xpose.msra.mxu0 0
    %905 = vmatpush.bf16.xpose.msra.mxu0 0
    %906 = vmatpush.bf16.xpose.msra.mxu0 0
    %907 = vmatpush.bf16.xpose.msra.mxu0 0
    %908 = vmatpush.bf16.xpose.msra.mxu0 0
    %909 = vmatpush.bf16.xpose.msra.mxu0 0
    %910 = vmatpush.bf16.xpose.msra.mxu0 %v901
    %911 = vmatmul.bf16.gmra.mxu0 %v892
    %v912 = vpop.f32.mrf.mxu0
    %v913 = vadd.f32 %v44, %v912
    %v914 = vpop.f32.mrf.mxu0
    %v915 = vadd.f32 %v45, %v914
    %916 = vmatmul.bf16.gmra.mxu0 %v895
    %v917 = vpop.f32.mrf.mxu0
    %v918 = vadd.f32 %v46, %v917
    %v919 = vpop.f32.mrf.mxu0
    %v920 = vadd.f32 %v47, %v919
    %921 = vmatmul.bf16.gmra.mxu0 %v898
    %v922 = vpop.f32.mrf.mxu0
    %v923 = vadd.f32 %v48, %v922
    %v924 = vpop.f32.mrf.mxu0
    %925 = vdwg.mxu0
    %v926 = vsel %vm348, %v913, -inf
    %927 = vmax.xlane.f32.xlu0 %v926
    %v928 = vpop.xlane.xlu0 %927
    %v929 = vsel %vm348, %v915, -inf
    %930 = vmax.xlane.f32.xlu0 %v929
    %v931 = vpop.xlane.xlu0 %930
    %v932 = vsel %vm348, %v918, -inf
    %933 = vmax.xlane.f32.xlu0 %v932
    %v934 = vpop.xlane.xlu0 %933
    %v935 = vsel %vm348, %v920, -inf
    %936 = vmax.xlane.f32.xlu0 %v935
    %v937 = vpop.xlane.xlu0 %936
    %v938 = vsel %vm348, %v923, -inf
    %939 = vmax.xlane.f32.xlu0 %v938
    %v940 = vpop.xlane.xlu0 %939
    %v941 = vsub.f32 %v913, %v928
    %v942 = vsub.f32 %v915, %v931
    %v943 = vsub.f32 %v918, %v934
    %v944 = vsub.f32 %v920, %v937
    %v945 = vsub.f32 %v923, %v940
    %v946 = vmul.f32 %v941, 1.442695
    %v947 = vpow.pop %v946
    %v948 = vmul.f32 %v942, 1.442695
    %v949 = vpow.pop %v948
    %v950 = vmul.f32 %v943, 1.442695
    %v951 = vpow.pop %v950
    %v952 = vmul.f32 %v944, 1.442695
    %v953 = vpow.pop %v952
    %v954 = vmul.f32 %v945, 1.442695
    %v955 = vpow.pop %v954
    %v956 = vsel %vm348, %v947, 0.0
    %957 = vadd.xlane.f32.xlu0 %v956
    %v958 = vpop.xlane.xlu0 %957
    %v959 = vsel %vm348, %v949, 0.0
    %960 = vadd.xlane.f32.xlu0 %v959
    %v961 = vpop.xlane.xlu0 %960
    %v962 = vsel %vm348, %v951, 0.0
    %963 = vadd.xlane.f32.xlu0 %v962
    %v964 = vpop.xlane.xlu0 %963
    %v965 = vsel %vm348, %v953, 0.0
    %966 = vadd.xlane.f32.xlu0 %v965
    %v967 = vpop.xlane.xlu0 %966
    %v968 = vsel %vm348, %v955, 0.0
    %969 = vadd.xlane.f32.xlu0 %v968
    %v970 = vpop.xlane.xlu0 %969
    %v971 = vrcp.pop %v958
    %v972 = vrcp.pop %v961
    %v973 = vrcp.pop %v964
    %v974 = vrcp.pop %v967
    %v975 = vrcp.pop %v970
    %v976 = vmul.f32 %v947, %v971
    %v977 = vmul.f32 %v949, %v972
    %v978 = vmul.f32 %v951, %v973
    %v979 = vmul.f32 %v953, %v974
    %v980 = vmul.f32 %v955, %v975
    %v981 = vpack.c.bf16 %v977, %v976
    %v982 = vpack.c.bf16 %v979, %v978
    %v983 = vpack.c.bf16 %v980, %v980
    %984 = vrot.lane.b32.xlu0 %v887, 64
    %v985 = vpop.permute.xlu0 %984
    %v987 = vsel %vm348, %v981, 0
    %v990 = vsel %vm348, %v982, 0
    %v993 = vsel %vm348, %v983, 0
    %v996 = vsel %vm418, %v985, 0
    %998 = vmatpush.bf16.msra.mxu0 0
    %999 = vmatpush.bf16.msra.mxu0 0
    %1000 = vmatpush.bf16.msra.mxu0 0
    %1001 = vmatpush.bf16.msra.mxu0 0
    %1002 = vmatpush.bf16.msra.mxu0 0
    %1003 = vmatpush.bf16.msra.mxu0 0
    %1004 = vmatpush.bf16.msra.mxu0 0
    %1005 = vmatpush.bf16.msra.mxu0 %v996
    %1006 = vmatmul.bf16.gmra.mxu0 %v987
    %v1007 = vpop.f32.mrf.mxu0
    %v1008 = vadd.f32 0.0, %v1007
    %v1009 = vpop.f32.mrf.mxu0
    %v1010 = vadd.f32 0.0, %v1009
    %1011 = vmatmul.bf16.gmra.mxu0 %v990
    %v1012 = vpop.f32.mrf.mxu0
    %v1013 = vadd.f32 0.0, %v1012
    %v1014 = vpop.f32.mrf.mxu0
    %v1015 = vadd.f32 0.0, %v1014
    %1016 = vmatmul.bf16.gmra.mxu0 %v993
    %v1017 = vpop.f32.mrf.mxu0
    %v1018 = vadd.f32 0.0, %v1017
    %v1019 = vpop.f32.mrf.mxu0
    %1020 = vdwg.mxu0
    %v1021 = vmul.f32 %v1008, %v39
    %v1022 = vmul.f32 %v1010, %v40
    %v1023 = vmul.f32 %v1013, %v41
    %v1024 = vmul.f32 %v1015, %v42
    %v1025 = vmul.f32 %v1018, %v43
    %v1028 = vrot.slane %v1022, 2
    %v1029 = vrot.slane %v1023, 2
    %v1030 = vsel %vm292, %v1028, %v1029
    %v1033 = vadd.f32 %v1021, %v1030
    %v1034 = vadd.f32 %v1022, %v1029
    %v1036 = vrot.slane %v1023, 4
    %v1037 = vrot.slane %v1024, 4
    %v1038 = vsel %vm286, %v1036, %v1037
    %v1041 = vadd.f32 %v1033, %v1038
    %v1042 = vadd.f32 %v1034, %v1037
    %v1044 = vrot.slane %v1024, 6
    %v1045 = vrot.slane %v1025, 6
    %v1046 = vsel %vm280, %v1044, %v1045
    %v1049 = vadd.f32 %v1041, %v1046
    %v1050 = vadd.f32 %v1042, %v1045
    %s1051 = scalar_lea.vmem %s5, 16
    %v1052 = vld [vmem:[%s1051] sm:$0xf]
    %v1053 = vld [vmem:[%s1051 + $0x4] sm:$0xf]
    %v1054 = vld [vmem:[%s1051 + $0x8] sm:$0xf]
    %v1055 = vld [vmem:[%s1051 + $0xc] sm:$0xf]
    %v1056 = vpack.c.bf16 %v1050, %v1049
    %v1061 = vunpack.c.l.b16 %v1052
    %v1062 = vunpack.c.l.b16 %v1053
    %v1063 = vunpack.c.l.b16 %v1054
    %v1064 = vunpack.c.l.b16 %v1055
    %v1065 = vpack.c.b16 %v1062, %v1061
    %v1066 = vpack.c.b16 %v1064, %v1063
    %v1070 = vsel %vm184, %v1056, 0
    %1072 = vmatpush.bf16.msra.mxu0 0
    %1073 = vmatpush.bf16.msra.mxu0 0
    %1074 = vmatpush.bf16.msra.mxu0 0
    %1075 = vmatpush.bf16.msra.mxu0 0
    %1076 = vmatpush.bf16.msra.mxu0 0
    %1077 = vmatpush.bf16.msra.mxu0 0
    %1078 = vmatpush.bf16.msra.mxu0 %v1066
    %1079 = vmatpush.bf16.msra.mxu0 %v1065
    %1080 = vmatmul.bf16.gmra.mxu0 %v1070
    %v1081 = vpop.f32.mrf.mxu0
    %v1082 = vadd.f32 0.0, %v1081
    %v1083 = vpop.f32.mrf.mxu0
    %v1084 = vadd.f32 0.0, %v1083
    %1085 = vdwg.mxu0
    %v1086 = vadd.f32 %v769, %v1082
    %v1087 = vadd.f32 %v770, %v1084
    %v1088 = vperm.slane %v772, 3
    %v1089 = vadd.f32 %v1086, %v1088
    %v1090 = vadd.f32 %v1087, %v1088
    %v1091 = vsel %vm184, %v1089, 0.0
    %1092 = vadd.xlane.f32.xlu0 %v1091
    %v1093 = vpop.xlane.xlu0 %1092
    %v1094 = vsel %vm188, %v1090, 0.0
    %1095 = vadd.xlane.f32.xlu0 %v1094
    %v1096 = vpop.xlane.xlu0 %1095
    %v1097 = vmul.f32 %v1093, %v198
    %v1098 = vmul.f32 %v1096, %v198
    %v1099 = vsub.f32 %v1089, %v1097
    %v1100 = vsub.f32 %v1090, %v1098
    %v1101 = vmul.f32 %v1099, %v1099
    %v1102 = vmul.f32 %v1100, %v1100
    %v1103 = vsel %vm184, %v1101, 0.0
    %1104 = vadd.xlane.f32.xlu0 %v1103
    %v1105 = vpop.xlane.xlu0 %1104
    %v1106 = vsel %vm188, %v1102, 0.0
    %1107 = vadd.xlane.f32.xlu0 %v1106
    %v1108 = vpop.xlane.xlu0 %1107
    %v1109 = vmul.f32 %v1105, %v198
    %v1110 = vmul.f32 %v1108, %v198
    %v1111 = vadd.f32 %v1109, 1e-06
    %v1112 = vadd.f32 %v1110, 1e-06
    %v1113 = vrsqrt.pop %v1111
    %v1114 = vmul.f32 %v1113, %v1111
    %v1115 = vmul.f32 %v1114, %v1113
    %v1116 = vmul.f32 0.5, %v1115
    %v1117 = vsub.f32 1.5, %v1116
    %v1118 = vmul.f32 %v1113, %v1117
    %vm1119 = vweird.f32 %v1111
    %vm1120 = vweird.f32 %v1113
    %vm1121 = vmor %vm1119, %vm1120
    %v1122 = vsel %vm1121, %v1113, %v1118
    %v1123 = vrsqrt.pop %v1112
    %v1124 = vmul.f32 %v1123, %v1112
    %v1125 = vmul.f32 %v1124, %v1123
    %v1126 = vmul.f32 0.5, %v1125
    %v1127 = vsub.f32 1.5, %v1126
    %v1128 = vmul.f32 %v1123, %v1127
    %vm1129 = vweird.f32 %v1112
    %vm1130 = vweird.f32 %v1123
    %vm1131 = vmor %vm1129, %vm1130
    %v1132 = vsel %vm1131, %v1123, %v1128
    %v1133 = vmul.f32 %v1099, %v1122
    %v1134 = vmul.f32 %v1100, %v1132
    %v1135 = vperm.slane %v772, 4
    %v1136 = vmul.f32 %v1133, %v1135
    %v1137 = vmul.f32 %v1134, %v1135
    %v1138 = vperm.slane %v772, 5
    %v1139 = vadd.f32 %v1136, %v1138
    %v1140 = vadd.f32 %v1137, %v1138
    %s1141 = scalar_lea.vmem %s6, 16
    %v1142 = vld [vmem:[%s1141] sm:$0xf]
    %v1143 = vld [vmem:[%s1141 + $0x4] sm:$0xf]
    %v1144 = vld [vmem:[%s1141 + $0x8] sm:$0xf]
    %v1145 = vld [vmem:[%s1141 + $0xc] sm:$0xf]
    %v1146 = vpack.c.bf16 %v1140, %v1139
    %v1147 = vperm.slane %v772, 6
    %v1152 = vunpack.c.l.b16 %v1142
    %v1153 = vunpack.c.l.b16 %v1143
    %v1154 = vunpack.c.l.b16 %v1144
    %v1155 = vunpack.c.l.b16 %v1145
    %v1156 = vpack.c.b16 %v1153, %v1152
    %v1157 = vpack.c.b16 %v1155, %v1154
    %v1161 = vsel %vm184, %v1146, 0
    %1163 = vmatpush.bf16.msra.mxu0 0
    %1164 = vmatpush.bf16.msra.mxu0 0
    %1165 = vmatpush.bf16.msra.mxu0 0
    %1166 = vmatpush.bf16.msra.mxu0 0
    %1167 = vmatpush.bf16.msra.mxu0 0
    %1168 = vmatpush.bf16.msra.mxu0 0
    %1169 = vmatpush.bf16.msra.mxu0 %v1157
    %1170 = vmatpush.bf16.msra.mxu0 %v1156
    %1171 = vmatmul.bf16.gmra.mxu0 %v1161
    %v1172 = vpop.f32.mrf.mxu0
    %v1173 = vadd.f32 %v1147, %v1172
    %v1174 = vpop.f32.mrf.mxu0
    %v1175 = vadd.f32 %v1147, %v1174
    %1176 = vdwg.mxu0
    %v1177 = vmul.f32 %v1173, 0.5
    %v1178 = vmul.f32 %v1175, 0.5
    %v1179 = vmul.f32 %v1173, 0.70710677
    %v1180 = vmul.f32 %v1175, 0.70710677
    %v1181 = vmul.f32 %v1179, %v1179
    %v1182 = vmin.f32 16.0, %v1181
    %v1183 = vmul.f32 %v1182, 2.1237322e-06
    %v1184 = vadd.f32 %v1183, 0.00028619796
    %v1185 = vmul.f32 %v1182, %v1184
    %v1186 = vadd.f32 %v1185, 0.0036580483
    %v1187 = vmul.f32 %v1182, %v1186
    %v1188 = vadd.f32 %v1187, 0.05243302
    %v1189 = vmul.f32 %v1182, %v1188
    %v1190 = vadd.f32 %v1189, 0.18741608
    %v1191 = vmul.f32 %v1182, %v1190
    %v1192 = vadd.f32 %v1191, 1.1283791
    %v1193 = vmul.f32 %v1179, %v1192
    %v1194 = vmul.f32 %v1182, 3.8918573e-05
    %v1195 = vadd.f32 %v1194, 0.001143296
    %v1196 = vmul.f32 %v1182, %v1195
    %v1197 = vadd.f32 %v1196, 0.014752088
    %v1198 = vmul.f32 %v1182, %v1197
    %v1199 = vadd.f32 %v1198, 0.112945676
    %v1200 = vmul.f32 %v1182, %v1199
    %v1201 = vadd.f32 %v1200, 0.4994258
    %v1202 = vmul.f32 %v1182, %v1201
    %v1203 = vadd.f32 %v1202, 1.0
    %v1204 = vrcp.pop %v1203
    %v1205 = vmul.f32 %v1203, %v1204
    %v1206 = vsub.f32 1.0, %v1205
    %v1207 = vmul.f32 %v1204, %v1206
    %v1208 = vadd.f32 %v1204, %v1207
    %vm1209 = vweird.f32 %v1203
    %vm1210 = vweird.f32 %v1204
    %vm1211 = vmor %vm1209, %vm1210
    %v1212 = vsel %vm1211, %v1204, %v1208
    %v1213 = vand.u32 2147483647, %v1203
    %vm1214 = vcmp.eq.f32.partialorder %v1213, 8.507059e+37
    %v1215 = vand.u32 %v1203, 2147483648
    %v1216 = vor.u32 1.1754944e-38, %v1215
    %v1217 = vsel %vm1214, %v1216, %v1212
    %v1218 = vmul.f32 %v1193, %v1217
    %v1219 = vmin.f32 %v1218, 1.0
    %v1220 = vmax.f32 %v1219, -1.0
    %v1221 = vmul.f32 %v1180, %v1180
    %v1222 = vmin.f32 16.0, %v1221
    %v1223 = vmul.f32 %v1222, 2.1237322e-06
    %v1224 = vadd.f32 %v1223, 0.00028619796
    %v1225 = vmul.f32 %v1222, %v1224
    %v1226 = vadd.f32 %v1225, 0.0036580483
    %v1227 = vmul.f32 %v1222, %v1226
    %v1228 = vadd.f32 %v1227, 0.05243302
    %v1229 = vmul.f32 %v1222, %v1228
    %v1230 = vadd.f32 %v1229, 0.18741608
    %v1231 = vmul.f32 %v1222, %v1230
    %v1232 = vadd.f32 %v1231, 1.1283791
    %v1233 = vmul.f32 %v1180, %v1232
    %v1234 = vmul.f32 %v1222, 3.8918573e-05
    %v1235 = vadd.f32 %v1234, 0.001143296
    %v1236 = vmul.f32 %v1222, %v1235
    %v1237 = vadd.f32 %v1236, 0.014752088
    %v1238 = vmul.f32 %v1222, %v1237
    %v1239 = vadd.f32 %v1238, 0.112945676
    %v1240 = vmul.f32 %v1222, %v1239
    %v1241 = vadd.f32 %v1240, 0.4994258
    %v1242 = vmul.f32 %v1222, %v1241
    %v1243 = vadd.f32 %v1242, 1.0
    %v1244 = vrcp.pop %v1243
    %v1245 = vmul.f32 %v1243, %v1244
    %v1246 = vsub.f32 1.0, %v1245
    %v1247 = vmul.f32 %v1244, %v1246
    %v1248 = vadd.f32 %v1244, %v1247
    %vm1249 = vweird.f32 %v1243
    %vm1250 = vweird.f32 %v1244
    %vm1251 = vmor %vm1249, %vm1250
    %v1252 = vsel %vm1251, %v1244, %v1248
    %v1253 = vand.u32 2147483647, %v1243
    %vm1254 = vcmp.eq.f32.partialorder %v1253, 8.507059e+37
    %v1255 = vand.u32 %v1243, 2147483648
    %v1256 = vor.u32 1.1754944e-38, %v1255
    %v1257 = vsel %vm1254, %v1256, %v1252
    %v1258 = vmul.f32 %v1233, %v1257
    %v1259 = vmin.f32 %v1258, 1.0
    %v1260 = vmax.f32 %v1259, -1.0
    %v1261 = vadd.f32 %v1220, 1.0
    %v1262 = vadd.f32 %v1260, 1.0
    %v1263 = vmul.f32 %v1177, %v1261
    %v1264 = vmul.f32 %v1178, %v1262
    %s1265 = scalar_lea.vmem %s7, 64
    %v1266 = vld [vmem:[%s1265] sm:$0xf]
    %v1267 = vld [vmem:[%s1265 + $0x4] sm:$0xf]
    %v1268 = vld [vmem:[%s1265 + $0x8] sm:$0xf]
    %v1269 = vld [vmem:[%s1265 + $0xc] sm:$0xf]
    %v1270 = vld [vmem:[%s1265 + $0x10] sm:$0xf]
    %v1271 = vld [vmem:[%s1265 + $0x14] sm:$0xf]
    %v1272 = vld [vmem:[%s1265 + $0x18] sm:$0xf]
    %v1273 = vld [vmem:[%s1265 + $0x1c] sm:$0xf]
    %v1274 = vld [vmem:[%s1265 + $0x20] sm:$0xf]
    %v1275 = vld [vmem:[%s1265 + $0x24] sm:$0xf]
    %v1276 = vld [vmem:[%s1265 + $0x28] sm:$0xf]
    %v1277 = vld [vmem:[%s1265 + $0x2c] sm:$0xf]
    %v1278 = vld [vmem:[%s1265 + $0x30] sm:$0xf]
    %v1279 = vld [vmem:[%s1265 + $0x34] sm:$0xf]
    %v1280 = vld [vmem:[%s1265 + $0x38] sm:$0xf]
    %v1281 = vld [vmem:[%s1265 + $0x3c] sm:$0xf]
    %v1282 = vpack.c.bf16 %v1264, %v1263
    %v1299 = vunpack.c.l.b16 %v1266
    %v1300 = vunpack.c.l.b16 %v1267
    %v1301 = vunpack.c.l.b16 %v1268
    %v1302 = vunpack.c.l.b16 %v1269
    %v1303 = vunpack.c.l.b16 %v1270
    %v1304 = vunpack.c.l.b16 %v1271
    %v1305 = vunpack.c.l.b16 %v1272
    %v1306 = vunpack.c.l.b16 %v1273
    %v1307 = vunpack.c.l.b16 %v1274
    %v1308 = vunpack.c.l.b16 %v1275
    %v1309 = vunpack.c.l.b16 %v1276
    %v1310 = vunpack.c.l.b16 %v1277
    %v1311 = vunpack.c.l.b16 %v1278
    %v1312 = vunpack.c.l.b16 %v1279
    %v1313 = vunpack.c.l.b16 %v1280
    %v1314 = vunpack.c.l.b16 %v1281
    %v1315 = vpack.c.b16 %v1300, %v1299
    %v1316 = vpack.c.b16 %v1302, %v1301
    %v1317 = vpack.c.b16 %v1304, %v1303
    %v1318 = vpack.c.b16 %v1306, %v1305
    %v1319 = vpack.c.b16 %v1308, %v1307
    %v1320 = vpack.c.b16 %v1310, %v1309
    %v1321 = vpack.c.b16 %v1312, %v1311
    %v1322 = vpack.c.b16 %v1314, %v1313
    %1331 = vmatpush.bf16.msra.mxu0 %v1322
    %1332 = vmatpush.bf16.msra.mxu0 %v1321
    %1333 = vmatpush.bf16.msra.mxu0 %v1320
    %1334 = vmatpush.bf16.msra.mxu0 %v1319
    %1335 = vmatpush.bf16.msra.mxu0 %v1318
    %1336 = vmatpush.bf16.msra.mxu0 %v1317
    %1337 = vmatpush.bf16.msra.mxu0 %v1316
    %1338 = vmatpush.bf16.msra.mxu0 %v1315
    %1339 = vmatmul.bf16.gmra.mxu0 %v1282
    %v1340 = vpop.f32.mrf.mxu0
    %v1341 = vadd.f32 0.0, %v1340
    %v1342 = vpop.f32.mrf.mxu0
    %1343 = vdwg.mxu0
    %v1344 = vadd.f32 %v1089, %v1341
    %v1345 = vperm.slane %v772, 7
    %v1346 = vadd.f32 %v1344, %v1345
    %v1348 = vrot.slane %v1346, 4
    %vm1350 = vcmask 1040384
    %v1351 = vsel %vm1350, %v1346, %v1348
    %v1352 = vsel %vm188, %v1351, 0.0
    %1353 = vadd.xlane.f32.xlu0 %v1352
    %v1354 = vpop.xlane.xlu0 %1353
    %v1355 = vmul.f32 %v1354, %v198
    %v1356 = vsub.f32 %v1351, %v1355
    %v1357 = vmul.f32 %v1356, %v1356
    %v1358 = vsel %vm188, %v1357, 0.0
    %1359 = vadd.xlane.f32.xlu0 %v1358
    %v1360 = vpop.xlane.xlu0 %1359
    %v1361 = vmul.f32 %v1360, %v198
    %v1362 = vadd.f32 %v1361, 1e-06
    %v1363 = vrsqrt.pop %v1362
    %v1364 = vmul.f32 %v1363, %v1362
    %v1365 = vmul.f32 %v1364, %v1363
    %v1366 = vmul.f32 0.5, %v1365
    %v1367 = vsub.f32 1.5, %v1366
    %v1368 = vmul.f32 %v1363, %v1367
    %vm1369 = vweird.f32 %v1362
    %vm1370 = vweird.f32 %v1363
    %vm1371 = vmor %vm1369, %vm1370
    %v1372 = vsel %vm1371, %v1363, %v1368
    %v1373 = vmul.f32 %v1356, %v1372
    %v1374 = vperm.slane %v38, 2
    %v1375 = vmul.f32 %v1373, %v1374
    %v1376 = vperm.slane %v38, 3
    %v1377 = vadd.f32 %v1375, %v1376
    %1378 = vst.msk [vmem:[#allocation2] sm:$0x3] %vm188, %v1377
    // Predicated region
    $region42: #{build_mix_vit_forward.1} parent=1 // pred_check
      _
    $region43: #{build_mix_vit_forward.1} parent=1 // pred_check_branch
      %1380 = sbr.rel (0) target = $region45
    $region44: #{build_mix_vit_forward.1} parent=1 // pred_region
      %1382 = vsyncadd [#allocation3], 0
      %s1384 = sshll.u32 [#allocation2], 4
      %s1385 = int_to_ptr.vmem [resolvable:$true] %s1384
      %s1386 = sshll.u32 %s10, 4
      %s1387 = int_to_ptr.hbm [resolvable:$true] %s1386
      %1389 = dma.vmem_to_hbm [thread:$0]  %s1385, 32, %s1387, [#allocation3]
    $region45: #{build_mix_vit_forward.1} parent=1 // pred_fallthru
      _
    // Predicated region
    $region46: #{build_mix_vit_forward.1} parent=1 // pred_check
      _
    $region47: #{build_mix_vit_forward.1} parent=1 // pred_check_branch
      %1391 = sbr.rel (0) target = $region49
    $region48: #{build_mix_vit_forward.1} parent=1 // pred_region
      %1393 = dma.done [#allocation3], 32
    $region49: #{build_mix_vit_forward.1} parent=1 // pred_fallthru
      _
    %1394 = vsyncpa [#allocation3], 1

</llo_original>
